<compile_context>
chip_gen: v6e
topology: v6e:2x2x1
jax: 0.10.0
libtpu: 0.0.40
codegen_flags: <defaults>
</compile_context>

<pallas_src>
import functools

import jax
import jax.numpy as jnp
from jax import lax
from jax.experimental import pallas as pl
from jax.experimental.pallas import tpu as pltpu

_LANE = 128
_SUBLANE = 8


def _round_up(x, m):
    return (x + m - 1) // m * m


def _gru_head_kernel(x_ref,        # (Tc, Bb, Dp)   bf16, time-major chunk
                     wih_ref,      # (Dp, 3Hp)      bf16, W_ih^T (gate-padded)
                     whh_ref,      # (Hp, 3Hp)      bf16, W_hh^T (gate-padded)
                     bih_ref,      # (1, 3Hp)       f32
                     bhh_ref,      # (1, 3Hp)       f32
                     wlin_ref,     # (1, Hp)        f32, linear weight row
                     blin_ref,     # (1, 1)         f32
                     out_ref,      # (Bb, 128)      f32, lane-dense output slab
                     xproj_ref,    # VMEM scratch (Tc, Bb, 3Hp) f32
                     h_ref,        # VMEM scratch (Bb, Hp) f32 (persistent)
                     *, Tc, Bb, Dp, Hp, T, T_pad, unroll):
    t_chunk = pl.program_id(1)

    @pl.when(t_chunk == 0)
    def _():
        h_ref[...] = jnp.zeros_like(h_ref)

    # ---- hot path 1: input projection for this time chunk (one bf16 MXU matmul,
    #      f32 accumulate); b_ih folded in once per chunk. Leading-dim merge is
    #      copy-free since Bb % 8 == 0 and Dp % 128 == 0.
    x_chunk = x_ref[...].reshape(Tc * Bb, Dp)
    xp = jnp.dot(x_chunk, wih_ref[...], preferred_element_type=jnp.float32)
    xproj_ref[...] = (xp + bih_ref[...]).reshape(Tc, Bb, 3 * Hp)

    # ---- hot path 2: sequential GRU recurrence; h carried in vregs.
    whh = whh_ref[...]                                   # (Hp, 3Hp) bf16
    bhh = jnp.broadcast_to(bhh_ref[...], (Bb, 3 * Hp))   # hoisted broadcast
    t_base = t_chunk * Tc

    def step(t, h):
        xp_t = xproj_ref[t]                              # (Bb, 3Hp), lane aligned
        hp = jnp.dot(h.astype(jnp.bfloat16), whh,
                     preferred_element_type=jnp.float32) + bhh
        xr, xz, xn = xp_t[:, :Hp], xp_t[:, Hp:2 * Hp], xp_t[:, 2 * Hp:]
        hr, hz, hn = hp[:, :Hp], hp[:, Hp:2 * Hp], hp[:, 2 * Hp:]
        r = jax.nn.sigmoid(xr + hr)
        z = jax.nn.sigmoid(xz + hz)
        n = jnp.tanh(xn + r * hn)
        h_new = (1.0 - z) * n + z * h
        if T_pad != T:                                   # mask padded timesteps
            h_new = jnp.where(t_base + t < T, h_new, h)
        return h_new

    h_final = lax.fori_loop(0, Tc, step, h_ref[...], unroll=unroll)
    h_ref[...] = h_final                                 # one store per chunk

    # ---- head: linear(H -> 1) as a VPU/XLU reduction, lane-dense store.
    @pl.when(t_chunk == pl.num_programs(1) - 1)
    def _():
        head = (jnp.sum(h_final * wlin_ref[...], axis=-1, keepdims=True)
                + blin_ref[...])                         # (Bb, 1)
        out_ref[...] = jnp.broadcast_to(head, out_ref.shape).astype(out_ref.dtype)


def predictive_emotion_forward(x, params, *, chunk_vmem_bytes=4 << 20):
    """x: (B, T, D) float32 (batch_first, matching the PyTorch module)."""
    B, T, D = x.shape
    H = params["w_hh_t"].shape[0]

    Dp = _round_up(D, _LANE)
    Hp = _round_up(H, _LANE)

    B8 = _round_up(B, _SUBLANE)
    if B8 <= _LANE:
        Bb, B_pad = B8, B8                 # single batch block
    else:
        Bb, B_pad = _LANE, _round_up(B, _LANE)

    # Conservative per-chunk VMEM budget (fits v5e/v6e/v7x default scoped VMEM):
    # xproj f32 chunk + double-buffered bf16 x chunk.
    per_step = Bb * (3 * Hp * 4 + 2 * Dp * 2)
    Tc = int(max(1, min(T, chunk_vmem_bytes // per_step)))
    T_pad = _round_up(T, Tc)
    n_t, n_b = T_pad // Tc, B_pad // Bb
    unroll = int(min(Tc, 8))

    # ---- XLA-side layout plumbing: time-major, pad to tile multiples, bf16 x.
    x_tbd = jnp.transpose(x, (1, 0, 2))
    x_tbd = jnp.pad(x_tbd, ((0, T_pad - T), (0, B_pad - B), (0, Dp - D)))
    x_tbd = x_tbd.astype(jnp.bfloat16)

    def pad_gates(m):   # (rows, 3H) -> (rows, 3Hp), each gate slab lane-aligned
        parts = [jnp.pad(m[:, g * H:(g + 1) * H], ((0, 0), (0, Hp - H)))
                 for g in range(3)]
        return jnp.concatenate(parts, axis=1)

    w_ih = jnp.pad(pad_gates(params["w_ih_t"]), ((0, Dp - D), (0, 0)))
    w_hh = jnp.pad(pad_gates(params["w_hh_t"]), ((0, Hp - H), (0, 0)))
    w_ih = w_ih.astype(jnp.bfloat16)                     # (Dp, 3Hp)
    w_hh = w_hh.astype(jnp.bfloat16)                     # (Hp, 3Hp)
    b_ih = pad_gates(params["b_ih"]).astype(jnp.float32)   # (1, 3Hp)
    b_hh = pad_gates(params["b_hh"]).astype(jnp.float32)   # (1, 3Hp)
    w_lin = jnp.pad(params["w_lin_t"].reshape(1, H),
                    ((0, 0), (0, Hp - H))).astype(jnp.float32)   # (1, Hp)
    b_lin = params["b_lin"].astype(jnp.float32)          # (1, 1)

    kernel = functools.partial(_gru_head_kernel, Tc=Tc, Bb=Bb, Dp=Dp, Hp=Hp,
                               T=T, T_pad=T_pad, unroll=unroll)

    out = pl.pallas_call(
        kernel,
        out_shape=jax.ShapeDtypeStruct((B_pad, _LANE), jnp.float32),
        grid=(n_b, n_t),
        in_specs=[
            pl.BlockSpec((Tc, Bb, Dp), lambda b, t: (t, b, 0)),
            pl.BlockSpec((Dp, 3 * Hp), lambda b, t: (0, 0)),
            pl.BlockSpec((Hp, 3 * Hp), lambda b, t: (0, 0)),
            pl.BlockSpec((1, 3 * Hp), lambda b, t: (0, 0)),
            pl.BlockSpec((1, 3 * Hp), lambda b, t: (0, 0)),
            pl.BlockSpec((1, Hp), lambda b, t: (0, 0)),
            pl.BlockSpec((1, 1), lambda b, t: (0, 0)),
        ],
        out_specs=pl.BlockSpec((Bb, _LANE), lambda b, t: (b, 0)),
        scratch_shapes=[
            pltpu.VMEM((Tc, Bb, 3 * Hp), jnp.float32),   # per-chunk x projections
            pltpu.VMEM((Bb, Hp), jnp.float32),           # persistent hidden state
        ],
        compiler_params=pltpu.CompilerParams(
            dimension_semantics=("parallel", "arbitrary")),
    )(x_tbd, w_ih, w_hh, b_ih, b_hh, w_lin, b_lin)

    return out[:B, :1]


def _reference_forward(x, params, *, bf16_matmuls=False):
    """Pure-JAX reference GRU + linear head (optionally bf16 MXU operands)."""
    B, T, D = x.shape
    H = params["w_hh_t"].shape[0]
    w_ih_t, w_hh_t = params["w_ih_t"], params["w_hh_t"]
    b_ih, b_hh = params["b_ih"][0], params["b_hh"][0]
    if bf16_matmuls:
        w_ih_t = w_ih_t.astype(jnp.bfloat16)
        w_hh_t = w_hh_t.astype(jnp.bfloat16)

    def step(h, x_t):
        if bf16_matmuls:
            xp = jnp.dot(x_t.astype(jnp.bfloat16), w_ih_t,
                         preferred_element_type=jnp.float32) + b_ih
            hp = jnp.dot(h.astype(jnp.bfloat16), w_hh_t,
                         preferred_element_type=jnp.float32) + b_hh
        else:
            xp = x_t @ w_ih_t + b_ih
            hp = h @ w_hh_t + b_hh
        xr, xz, xn = xp[:, :H], xp[:, H:2 * H], xp[:, 2 * H:]
        hr, hz, hn = hp[:, :H], hp[:, H:2 * H], hp[:, 2 * H:]
        r = jax.nn.sigmoid(xr + hr)
        z = jax.nn.sigmoid(xz + hz)
        n = jnp.tanh(xn + r * hn)
        return (1.0 - z) * n + z * h, None

    h0 = jnp.zeros((B, H), jnp.float32)
    h_final, _ = lax.scan(step, h0, jnp.transpose(x, (1, 0, 2)))
    return h_final @ params["w_lin_t"] + params["b_lin"]


def init_params(key, input_dim, hidden_dim):
    """Deterministic init mirroring nn.GRU / nn.Linear (uniform(-1/sqrt(H), 1/sqrt(H)))."""
    k = 1.0 / jnp.sqrt(jnp.float32(hidden_dim))
    keys = jax.random.split(key, 6)
    u = lambda kk, shape: jax.random.uniform(kk, shape, jnp.float32, -k, k)
    # PyTorch stores weight_ih_l0 as (3H, D); we pass it transposed for the kernel.
    w_ih = u(keys[0], (3 * hidden_dim, input_dim))
    w_hh = u(keys[1], (3 * hidden_dim, hidden_dim))
    b_ih = u(keys[2], (1, 3 * hidden_dim))
    b_hh = u(keys[3], (1, 3 * hidden_dim))
    w_lin = u(keys[4], (1, hidden_dim))          # nn.Linear(hidden_dim, 1).weight
    b_lin = u(keys[5], (1, 1))
    return {
        "w_ih_t": w_ih.T,        # (D, 3H)  gate order [r | z | n]
        "w_hh_t": w_hh.T,        # (H, 3H)
        "b_ih": b_ih,            # (1, 3H)
        "b_hh": b_hh,            # (1, 3H)
        "w_lin_t": w_lin.T,      # (H, 1)
        "b_lin": b_lin,          # (1, 1)
    }


if __name__ == "__main__":
    B, T, D, H = 2, 8, 4, 32
    root = jax.random.PRNGKey(0)
    kx, kp = jax.random.split(root)

    x = jax.random.normal(kx, (B, T, D), dtype=jnp.float32)
    params = init_params(kp, D, H)

    out = jax.block_until_ready(predictive_emotion_forward(x, params))
    assert out.shape == (B, 1)

    # Kernel uses bf16 MXU operands with f32 accumulation: check tightly against
    # a precision-matched reference, and loosely against the pure-f32 reference.
    ref_bf16 = _reference_forward(x, params, bf16_matmuls=True)
    ref_f32 = _reference_forward(x, params, bf16_matmuls=False)
    assert jnp.allclose(out, ref_bf16, atol=5e-3, rtol=5e-3)
    assert jnp.allclose(out, ref_f32, atol=5e-2, rtol=5e-2)

    print("KERNEL_OK")
</pallas_src>

<mosaic_0001>
module attributes {stable_mosaic.version = 11 : i64} {
  func.func @_gru_head_kernel(%arg0: i32, %arg1: i32, %arg2: memref<8x8x128xbf16, #tpu.memory_space<vmem>>, %arg3: memref<128x384xbf16, #tpu.memory_space<vmem>>, %arg4: memref<128x384xbf16, #tpu.memory_space<vmem>>, %arg5: memref<1x384xf32, #tpu.memory_space<vmem>>, %arg6: memref<1x384xf32, #tpu.memory_space<vmem>>, %arg7: memref<1x128xf32, #tpu.memory_space<vmem>>, %arg8: memref<1x1xf32, #tpu.memory_space<vmem>>, %arg9: memref<8x128xf32, #tpu.memory_space<vmem>>, %arg10: memref<8x8x384xf32, #tpu.memory_space<vmem>>, %arg11: memref<8x128xf32, #tpu.memory_space<vmem>>) attributes {dimension_semantics = [#tpu.dimension_semantics<parallel>, #tpu.dimension_semantics<arbitrary>], iteration_bounds = array<i64: 1, 1>, scalar_prefetch = 0 : i64, scratch_operands = 2 : i64, tpu.core_type = #tpu.core_type<tc>, window_params = [{transform_indices = @transform_0, window_bounds = array<i64: 8, 8, 128>}, {pipeline_mode = #tpu.pipeline_mode<synchronous>, transform_indices = @transform_1, window_bounds = array<i64: 128, 384>}, {pipeline_mode = #tpu.pipeline_mode<synchronous>, transform_indices = @transform_2, window_bounds = array<i64: 128, 384>}, {pipeline_mode = #tpu.pipeline_mode<synchronous>, transform_indices = @transform_3, window_bounds = array<i64: 1, 384>}, {pipeline_mode = #tpu.pipeline_mode<synchronous>, transform_indices = @transform_4, window_bounds = array<i64: 1, 384>}, {pipeline_mode = #tpu.pipeline_mode<synchronous>, transform_indices = @transform_5, window_bounds = array<i64: 1, 128>}, {pipeline_mode = #tpu.pipeline_mode<synchronous>, transform_indices = @transform_6, window_bounds = array<i64: 1, 1>}, {transform_indices = @transform_7, window_bounds = array<i64: 8, 128>}]} {
    %c0_i32 = arith.constant 0 : i32
    %0 = arith.cmpi eq, %arg1, %c0_i32 : i32
    %1 = arith.extui %0 : i1 to i32
    %c0_i32_0 = arith.constant 0 : i32
    %2 = arith.cmpi ne, %1, %c0_i32_0 : i32
    scf.if %2 {
      %cst_69 = arith.constant 0.000000e+00 : f32
      %277 = vector.broadcast %cst_69 : f32 to vector<8x128xf32>
      %c0_70 = arith.constant 0 : index
      %c0_71 = arith.constant 0 : index
      %278 = vector.load %arg11[%c0_70, %c0_71] : memref<8x128xf32, #tpu.memory_space<vmem>>, vector<8x128xf32>
      tpu.vector_store %arg11[%c0_70, %c0_71], %277 {strides = array<i32>} : memref<8x128xf32, #tpu.memory_space<vmem>>, vector<8x128xf32>,
    } else {
    }
    %c0 = arith.constant 0 : index
    %c0_1 = arith.constant 0 : index
    %c0_2 = arith.constant 0 : index
    %3 = vector.load %arg2[%c0, %c0_1, %c0_2] : memref<8x8x128xbf16, #tpu.memory_space<vmem>>, vector<8x8x128xbf16>
    %4 = vector.shape_cast %3 : vector<8x8x128xbf16> to vector<64x128xbf16>
    %c0_3 = arith.constant 0 : index
    %c0_4 = arith.constant 0 : index
    %5 = vector.load %arg3[%c0_3, %c0_4] : memref<128x384xbf16, #tpu.memory_space<vmem>>, vector<128x384xbf16>
    %cst = arith.constant dense<0.000000e+00> : vector<64x384xf32>
    %6 = tpu.matmul %4, %5, %cst {dimension_numbers = #tpu.dot_dimension_numbers<[1], [0], [0], [1], [0, 0, 1, 1], [], []>} : vector<64x128xbf16>, vector<128x384xbf16>, vector<64x384xf32> -> vector<64x384xf32>
    %c0_5 = arith.constant 0 : index
    %c0_6 = arith.constant 0 : index
    %7 = vector.load %arg5[%c0_5, %c0_6] : memref<1x384xf32, #tpu.memory_space<vmem>>, vector<1x384xf32>
    %8 = vector.broadcast %7 : vector<1x384xf32> to vector<64x384xf32>
    %9 = arith.addf %6, %8 : vector<64x384xf32>
    %10 = vector.shape_cast %9 : vector<64x384xf32> to vector<8x8x384xf32>
    %c0_7 = arith.constant 0 : index
    %c0_8 = arith.constant 0 : index
    %c0_9 = arith.constant 0 : index
    %11 = vector.load %arg10[%c0_7, %c0_8, %c0_9] : memref<8x8x384xf32, #tpu.memory_space<vmem>>, vector<8x8x384xf32>
    tpu.vector_store %arg10[%c0_7, %c0_8, %c0_9], %10 {strides = array<i32>} : memref<8x8x384xf32, #tpu.memory_space<vmem>>, vector<8x8x384xf32>,
    %c0_10 = arith.constant 0 : index
    %c0_11 = arith.constant 0 : index
    %12 = vector.load %arg4[%c0_10, %c0_11] : memref<128x384xbf16, #tpu.memory_space<vmem>>, vector<128x384xbf16>
    %c0_12 = arith.constant 0 : index
    %c0_13 = arith.constant 0 : index
    %13 = vector.load %arg6[%c0_12, %c0_13] : memref<1x384xf32, #tpu.memory_space<vmem>>, vector<1x384xf32>
    %14 = vector.shape_cast %13 : vector<1x384xf32> to vector<1x384xf32>
    %15 = vector.broadcast %14 : vector<1x384xf32> to vector<8x384xf32>
    %c0_14 = arith.constant 0 : index
    %c0_15 = arith.constant 0 : index
    %16 = vector.load %arg11[%c0_14, %c0_15] : memref<8x128xf32, #tpu.memory_space<vmem>>, vector<8x128xf32>
    %c0_i32_16 = arith.constant 0 : i32
    %17 = arith.index_cast %c0_i32_16 : i32 to index
    %c0_17 = arith.constant 0 : index
    %c0_18 = arith.constant 0 : index
    %18 = vector.load %arg10[%17, %c0_17, %c0_18] : memref<8x8x384xf32, #tpu.memory_space<vmem>>, vector<1x8x384xf32>
    %19 = vector.shape_cast %18 : vector<1x8x384xf32> to vector<8x384xf32>
    %20 = arith.truncf %16 : vector<8x128xf32> to vector<8x128xbf16>
    %cst_19 = arith.constant dense<0.000000e+00> : vector<8x384xf32>
    %21 = tpu.matmul %20, %12, %cst_19 {dimension_numbers = #tpu.dot_dimension_numbers<[1], [0], [0], [1], [0, 0, 1, 1], [], []>} : vector<8x128xbf16>, vector<128x384xbf16>, vector<8x384xf32> -> vector<8x384xf32>
    %22 = arith.addf %21, %15 : vector<8x384xf32>
    %23 = vector.extract_strided_slice %19 {offsets = [0, 0], sizes = [8, 128], strides = [1, 1]} : vector<8x384xf32> to vector<8x128xf32>
    %24 = vector.extract_strided_slice %19 {offsets = [0, 128], sizes = [8, 128], strides = [1, 1]} : vector<8x384xf32> to vector<8x128xf32>
    %25 = vector.extract_strided_slice %19 {offsets = [0, 256], sizes = [8, 128], strides = [1, 1]} : vector<8x384xf32> to vector<8x128xf32>
    %26 = vector.extract_strided_slice %22 {offsets = [0, 0], sizes = [8, 128], strides = [1, 1]} : vector<8x384xf32> to vector<8x128xf32>
    %27 = vector.extract_strided_slice %22 {offsets = [0, 128], sizes = [8, 128], strides = [1, 1]} : vector<8x384xf32> to vector<8x128xf32>
    %28 = vector.extract_strided_slice %22 {offsets = [0, 256], sizes = [8, 128], strides = [1, 1]} : vector<8x384xf32> to vector<8x128xf32>
    %29 = arith.addf %23, %26 : vector<8x128xf32>
    %30 = arith.negf %29 : vector<8x128xf32>
    %31 = math.exp %30 : vector<8x128xf32>
    %cst_20 = arith.constant 1.000000e+00 : f32
    %32 = vector.broadcast %cst_20 : f32 to vector<8x128xf32>
    %33 = arith.addf %32, %31 : vector<8x128xf32>
    %34 = arith.divf %32, %33 : vector<8x128xf32>
    %35 = arith.addf %24, %27 : vector<8x128xf32>
    %36 = arith.negf %35 : vector<8x128xf32>
    %37 = math.exp %36 : vector<8x128xf32>
    %cst_21 = arith.constant 1.000000e+00 : f32
    %38 = vector.broadcast %cst_21 : f32 to vector<8x128xf32>
    %39 = arith.addf %38, %37 : vector<8x128xf32>
    %40 = arith.divf %38, %39 : vector<8x128xf32>
    %41 = arith.mulf %34, %28 : vector<8x128xf32>
    %42 = arith.addf %25, %41 : vector<8x128xf32>
    %43 = math.tanh %42 : vector<8x128xf32>
    %cst_22 = arith.constant 1.000000e+00 : f32
    %44 = vector.broadcast %cst_22 : f32 to vector<8x128xf32>
    %45 = arith.subf %44, %40 : vector<8x128xf32>
    %46 = arith.mulf %45, %43 : vector<8x128xf32>
    %47 = arith.mulf %40, %16 : vector<8x128xf32>
    %48 = arith.addf %46, %47 : vector<8x128xf32>
    %c1_i32 = arith.constant 1 : i32
    %49 = arith.index_cast %c1_i32 : i32 to index
    %c0_23 = arith.constant 0 : index
    %c0_24 = arith.constant 0 : index
    %50 = vector.load %arg10[%49, %c0_23, %c0_24] : memref<8x8x384xf32, #tpu.memory_space<vmem>>, vector<1x8x384xf32>
    %51 = vector.shape_cast %50 : vector<1x8x384xf32> to vector<8x384xf32>
    %52 = arith.truncf %48 : vector<8x128xf32> to vector<8x128xbf16>
    %cst_25 = arith.constant dense<0.000000e+00> : vector<8x384xf32>
    %53 = tpu.matmul %52, %12, %cst_25 {dimension_numbers = #tpu.dot_dimension_numbers<[1], [0], [0], [1], [0, 0, 1, 1], [], []>} : vector<8x128xbf16>, vector<128x384xbf16>, vector<8x384xf32> -> vector<8x384xf32>
    %54 = arith.addf %53, %15 : vector<8x384xf32>
    %55 = vector.extract_strided_slice %51 {offsets = [0, 0], sizes = [8, 128], strides = [1, 1]} : vector<8x384xf32> to vector<8x128xf32>
    %56 = vector.extract_strided_slice %51 {offsets = [0, 128], sizes = [8, 128], strides = [1, 1]} : vector<8x384xf32> to vector<8x128xf32>
    %57 = vector.extract_strided_slice %51 {offsets = [0, 256], sizes = [8, 128], strides = [1, 1]} : vector<8x384xf32> to vector<8x128xf32>
    %58 = vector.extract_strided_slice %54 {offsets = [0, 0], sizes = [8, 128], strides = [1, 1]} : vector<8x384xf32> to vector<8x128xf32>
    %59 = vector.extract_strided_slice %54 {offsets = [0, 128], sizes = [8, 128], strides = [1, 1]} : vector<8x384xf32> to vector<8x128xf32>
    %60 = vector.extract_strided_slice %54 {offsets = [0, 256], sizes = [8, 128], strides = [1, 1]} : vector<8x384xf32> to vector<8x128xf32>
    %61 = arith.addf %55, %58 : vector<8x128xf32>
    %62 = arith.negf %61 : vector<8x128xf32>
    %63 = math.exp %62 : vector<8x128xf32>
    %cst_26 = arith.constant 1.000000e+00 : f32
    %64 = vector.broadcast %cst_26 : f32 to vector<8x128xf32>
    %65 = arith.addf %64, %63 : vector<8x128xf32>
    %66 = arith.divf %64, %65 : vector<8x128xf32>
    %67 = arith.addf %56, %59 : vector<8x128xf32>
    %68 = arith.negf %67 : vector<8x128xf32>
    %69 = math.exp %68 : vector<8x128xf32>
    %cst_27 = arith.constant 1.000000e+00 : f32
    %70 = vector.broadcast %cst_27 : f32 to vector<8x128xf32>
    %71 = arith.addf %70, %69 : vector<8x128xf32>
    %72 = arith.divf %70, %71 : vector<8x128xf32>
    %73 = arith.mulf %66, %60 : vector<8x128xf32>
    %74 = arith.addf %57, %73 : vector<8x128xf32>
    %75 = math.tanh %74 : vector<8x128xf32>
    %cst_28 = arith.constant 1.000000e+00 : f32
    %76 = vector.broadcast %cst_28 : f32 to vector<8x128xf32>
    %77 = arith.subf %76, %72 : vector<8x128xf32>
    %78 = arith.mulf %77, %75 : vector<8x128xf32>
    %79 = arith.mulf %72, %48 : vector<8x128xf32>
    %80 = arith.addf %78, %79 : vector<8x128xf32>
    %c2_i32 = arith.constant 2 : i32
    %81 = arith.index_cast %c2_i32 : i32 to index
    %c0_29 = arith.constant 0 : index
    %c0_30 = arith.constant 0 : index
    %82 = vector.load %arg10[%81, %c0_29, %c0_30] : memref<8x8x384xf32, #tpu.memory_space<vmem>>, vector<1x8x384xf32>
    %83 = vector.shape_cast %82 : vector<1x8x384xf32> to vector<8x384xf32>
    %84 = arith.truncf %80 : vector<8x128xf32> to vector<8x128xbf16>
    %cst_31 = arith.constant dense<0.000000e+00> : vector<8x384xf32>
    %85 = tpu.matmul %84, %12, %cst_31 {dimension_numbers = #tpu.dot_dimension_numbers<[1], [0], [0], [1], [0, 0, 1, 1], [], []>} : vector<8x128xbf16>, vector<128x384xbf16>, vector<8x384xf32> -> vector<8x384xf32>
    %86 = arith.addf %85, %15 : vector<8x384xf32>
    %87 = vector.extract_strided_slice %83 {offsets = [0, 0], sizes = [8, 128], strides = [1, 1]} : vector<8x384xf32> to vector<8x128xf32>
    %88 = vector.extract_strided_slice %83 {offsets = [0, 128], sizes = [8, 128], strides = [1, 1]} : vector<8x384xf32> to vector<8x128xf32>
    %89 = vector.extract_strided_slice %83 {offsets = [0, 256], sizes = [8, 128], strides = [1, 1]} : vector<8x384xf32> to vector<8x128xf32>
    %90 = vector.extract_strided_slice %86 {offsets = [0, 0], sizes = [8, 128], strides = [1, 1]} : vector<8x384xf32> to vector<8x128xf32>
    %91 = vector.extract_strided_slice %86 {offsets = [0, 128], sizes = [8, 128], strides = [1, 1]} : vector<8x384xf32> to vector<8x128xf32>
    %92 = vector.extract_strided_slice %86 {offsets = [0, 256], sizes = [8, 128], strides = [1, 1]} : vector<8x384xf32> to vector<8x128xf32>
    %93 = arith.addf %87, %90 : vector<8x128xf32>
    %94 = arith.negf %93 : vector<8x128xf32>
    %95 = math.exp %94 : vector<8x128xf32>
    %cst_32 = arith.constant 1.000000e+00 : f32
    %96 = vector.broadcast %cst_32 : f32 to vector<8x128xf32>
    %97 = arith.addf %96, %95 : vector<8x128xf32>
    %98 = arith.divf %96, %97 : vector<8x128xf32>
    %99 = arith.addf %88, %91 : vector<8x128xf32>
    %100 = arith.negf %99 : vector<8x128xf32>
    %101 = math.exp %100 : vector<8x128xf32>
    %cst_33 = arith.constant 1.000000e+00 : f32
    %102 = vector.broadcast %cst_33 : f32 to vector<8x128xf32>
    %103 = arith.addf %102, %101 : vector<8x128xf32>
    %104 = arith.divf %102, %103 : vector<8x128xf32>
    %105 = arith.mulf %98, %92 : vector<8x128xf32>
    %106 = arith.addf %89, %105 : vector<8x128xf32>
    %107 = math.tanh %106 : vector<8x128xf32>
    %cst_34 = arith.constant 1.000000e+00 : f32
    %108 = vector.broadcast %cst_34 : f32 to vector<8x128xf32>
    %109 = arith.subf %108, %104 : vector<8x128xf32>
    %110 = arith.mulf %109, %107 : vector<8x128xf32>
    %111 = arith.mulf %104, %80 : vector<8x128xf32>
    %112 = arith.addf %110, %111 : vector<8x128xf32>
    %c3_i32 = arith.constant 3 : i32
    %113 = arith.index_cast %c3_i32 : i32 to index
    %c0_35 = arith.constant 0 : index
    %c0_36 = arith.constant 0 : index
    %114 = vector.load %arg10[%113, %c0_35, %c0_36] : memref<8x8x384xf32, #tpu.memory_space<vmem>>, vector<1x8x384xf32>
    %115 = vector.shape_cast %114 : vector<1x8x384xf32> to vector<8x384xf32>
    %116 = arith.truncf %112 : vector<8x128xf32> to vector<8x128xbf16>
    %cst_37 = arith.constant dense<0.000000e+00> : vector<8x384xf32>
    %117 = tpu.matmul %116, %12, %cst_37 {dimension_numbers = #tpu.dot_dimension_numbers<[1], [0], [0], [1], [0, 0, 1, 1], [], []>} : vector<8x128xbf16>, vector<128x384xbf16>, vector<8x384xf32> -> vector<8x384xf32>
    %118 = arith.addf %117, %15 : vector<8x384xf32>
    %119 = vector.extract_strided_slice %115 {offsets = [0, 0], sizes = [8, 128], strides = [1, 1]} : vector<8x384xf32> to vector<8x128xf32>
    %120 = vector.extract_strided_slice %115 {offsets = [0, 128], sizes = [8, 128], strides = [1, 1]} : vector<8x384xf32> to vector<8x128xf32>
    %121 = vector.extract_strided_slice %115 {offsets = [0, 256], sizes = [8, 128], strides = [1, 1]} : vector<8x384xf32> to vector<8x128xf32>
    %122 = vector.extract_strided_slice %118 {offsets = [0, 0], sizes = [8, 128], strides = [1, 1]} : vector<8x384xf32> to vector<8x128xf32>
    %123 = vector.extract_strided_slice %118 {offsets = [0, 128], sizes = [8, 128], strides = [1, 1]} : vector<8x384xf32> to vector<8x128xf32>
    %124 = vector.extract_strided_slice %118 {offsets = [0, 256], sizes = [8, 128], strides = [1, 1]} : vector<8x384xf32> to vector<8x128xf32>
    %125 = arith.addf %119, %122 : vector<8x128xf32>
    %126 = arith.negf %125 : vector<8x128xf32>
    %127 = math.exp %126 : vector<8x128xf32>
    %cst_38 = arith.constant 1.000000e+00 : f32
    %128 = vector.broadcast %cst_38 : f32 to vector<8x128xf32>
    %129 = arith.addf %128, %127 : vector<8x128xf32>
    %130 = arith.divf %128, %129 : vector<8x128xf32>
    %131 = arith.addf %120, %123 : vector<8x128xf32>
    %132 = arith.negf %131 : vector<8x128xf32>
    %133 = math.exp %132 : vector<8x128xf32>
    %cst_39 = arith.constant 1.000000e+00 : f32
    %134 = vector.broadcast %cst_39 : f32 to vector<8x128xf32>
    %135 = arith.addf %134, %133 : vector<8x128xf32>
    %136 = arith.divf %134, %135 : vector<8x128xf32>
    %137 = arith.mulf %130, %124 : vector<8x128xf32>
    %138 = arith.addf %121, %137 : vector<8x128xf32>
    %139 = math.tanh %138 : vector<8x128xf32>
    %cst_40 = arith.constant 1.000000e+00 : f32
    %140 = vector.broadcast %cst_40 : f32 to vector<8x128xf32>
    %141 = arith.subf %140, %136 : vector<8x128xf32>
    %142 = arith.mulf %141, %139 : vector<8x128xf32>
    %143 = arith.mulf %136, %112 : vector<8x128xf32>
    %144 = arith.addf %142, %143 : vector<8x128xf32>
    %c4_i32 = arith.constant 4 : i32
    %145 = arith.index_cast %c4_i32 : i32 to index
    %c0_41 = arith.constant 0 : index
    %c0_42 = arith.constant 0 : index
    %146 = vector.load %arg10[%145, %c0_41, %c0_42] : memref<8x8x384xf32, #tpu.memory_space<vmem>>, vector<1x8x384xf32>
    %147 = vector.shape_cast %146 : vector<1x8x384xf32> to vector<8x384xf32>
    %148 = arith.truncf %144 : vector<8x128xf32> to vector<8x128xbf16>
    %cst_43 = arith.constant dense<0.000000e+00> : vector<8x384xf32>
    %149 = tpu.matmul %148, %12, %cst_43 {dimension_numbers = #tpu.dot_dimension_numbers<[1], [0], [0], [1], [0, 0, 1, 1], [], []>} : vector<8x128xbf16>, vector<128x384xbf16>, vector<8x384xf32> -> vector<8x384xf32>
    %150 = arith.addf %149, %15 : vector<8x384xf32>
    %151 = vector.extract_strided_slice %147 {offsets = [0, 0], sizes = [8, 128], strides = [1, 1]} : vector<8x384xf32> to vector<8x128xf32>
    %152 = vector.extract_strided_slice %147 {offsets = [0, 128], sizes = [8, 128], strides = [1, 1]} : vector<8x384xf32> to vector<8x128xf32>
    %153 = vector.extract_strided_slice %147 {offsets = [0, 256], sizes = [8, 128], strides = [1, 1]} : vector<8x384xf32> to vector<8x128xf32>
    %154 = vector.extract_strided_slice %150 {offsets = [0, 0], sizes = [8, 128], strides = [1, 1]} : vector<8x384xf32> to vector<8x128xf32>
    %155 = vector.extract_strided_slice %150 {offsets = [0, 128], sizes = [8, 128], strides = [1, 1]} : vector<8x384xf32> to vector<8x128xf32>
    %156 = vector.extract_strided_slice %150 {offsets = [0, 256], sizes = [8, 128], strides = [1, 1]} : vector<8x384xf32> to vector<8x128xf32>
    %157 = arith.addf %151, %154 : vector<8x128xf32>
    %158 = arith.negf %157 : vector<8x128xf32>
    %159 = math.exp %158 : vector<8x128xf32>
    %cst_44 = arith.constant 1.000000e+00 : f32
    %160 = vector.broadcast %cst_44 : f32 to vector<8x128xf32>
    %161 = arith.addf %160, %159 : vector<8x128xf32>
    %162 = arith.divf %160, %161 : vector<8x128xf32>
    %163 = arith.addf %152, %155 : vector<8x128xf32>
    %164 = arith.negf %163 : vector<8x128xf32>
    %165 = math.exp %164 : vector<8x128xf32>
    %cst_45 = arith.constant 1.000000e+00 : f32
    %166 = vector.broadcast %cst_45 : f32 to vector<8x128xf32>
    %167 = arith.addf %166, %165 : vector<8x128xf32>
    %168 = arith.divf %166, %167 : vector<8x128xf32>
    %169 = arith.mulf %162, %156 : vector<8x128xf32>
    %170 = arith.addf %153, %169 : vector<8x128xf32>
    %171 = math.tanh %170 : vector<8x128xf32>
    %cst_46 = arith.constant 1.000000e+00 : f32
    %172 = vector.broadcast %cst_46 : f32 to vector<8x128xf32>
    %173 = arith.subf %172, %168 : vector<8x128xf32>
    %174 = arith.mulf %173, %171 : vector<8x128xf32>
    %175 = arith.mulf %168, %144 : vector<8x128xf32>
    %176 = arith.addf %174, %175 : vector<8x128xf32>
    %c5_i32 = arith.constant 5 : i32
    %177 = arith.index_cast %c5_i32 : i32 to index
    %c0_47 = arith.constant 0 : index
    %c0_48 = arith.constant 0 : index
    %178 = vector.load %arg10[%177, %c0_47, %c0_48] : memref<8x8x384xf32, #tpu.memory_space<vmem>>, vector<1x8x384xf32>
    %179 = vector.shape_cast %178 : vector<1x8x384xf32> to vector<8x384xf32>
    %180 = arith.truncf %176 : vector<8x128xf32> to vector<8x128xbf16>
    %cst_49 = arith.constant dense<0.000000e+00> : vector<8x384xf32>
    %181 = tpu.matmul %180, %12, %cst_49 {dimension_numbers = #tpu.dot_dimension_numbers<[1], [0], [0], [1], [0, 0, 1, 1], [], []>} : vector<8x128xbf16>, vector<128x384xbf16>, vector<8x384xf32> -> vector<8x384xf32>
    %182 = arith.addf %181, %15 : vector<8x384xf32>
    %183 = vector.extract_strided_slice %179 {offsets = [0, 0], sizes = [8, 128], strides = [1, 1]} : vector<8x384xf32> to vector<8x128xf32>
    %184 = vector.extract_strided_slice %179 {offsets = [0, 128], sizes = [8, 128], strides = [1, 1]} : vector<8x384xf32> to vector<8x128xf32>
    %185 = vector.extract_strided_slice %179 {offsets = [0, 256], sizes = [8, 128], strides = [1, 1]} : vector<8x384xf32> to vector<8x128xf32>
    %186 = vector.extract_strided_slice %182 {offsets = [0, 0], sizes = [8, 128], strides = [1, 1]} : vector<8x384xf32> to vector<8x128xf32>
    %187 = vector.extract_strided_slice %182 {offsets = [0, 128], sizes = [8, 128], strides = [1, 1]} : vector<8x384xf32> to vector<8x128xf32>
    %188 = vector.extract_strided_slice %182 {offsets = [0, 256], sizes = [8, 128], strides = [1, 1]} : vector<8x384xf32> to vector<8x128xf32>
    %189 = arith.addf %183, %186 : vector<8x128xf32>
    %190 = arith.negf %189 : vector<8x128xf32>
    %191 = math.exp %190 : vector<8x128xf32>
    %cst_50 = arith.constant 1.000000e+00 : f32
    %192 = vector.broadcast %cst_50 : f32 to vector<8x128xf32>
    %193 = arith.addf %192, %191 : vector<8x128xf32>
    %194 = arith.divf %192, %193 : vector<8x128xf32>
    %195 = arith.addf %184, %187 : vector<8x128xf32>
    %196 = arith.negf %195 : vector<8x128xf32>
    %197 = math.exp %196 : vector<8x128xf32>
    %cst_51 = arith.constant 1.000000e+00 : f32
    %198 = vector.broadcast %cst_51 : f32 to vector<8x128xf32>
    %199 = arith.addf %198, %197 : vector<8x128xf32>
    %200 = arith.divf %198, %199 : vector<8x128xf32>
    %201 = arith.mulf %194, %188 : vector<8x128xf32>
    %202 = arith.addf %185, %201 : vector<8x128xf32>
    %203 = math.tanh %202 : vector<8x128xf32>
    %cst_52 = arith.constant 1.000000e+00 : f32
    %204 = vector.broadcast %cst_52 : f32 to vector<8x128xf32>
    %205 = arith.subf %204, %200 : vector<8x128xf32>
    %206 = arith.mulf %205, %203 : vector<8x128xf32>
    %207 = arith.mulf %200, %176 : vector<8x128xf32>
    %208 = arith.addf %206, %207 : vector<8x128xf32>
    %c6_i32 = arith.constant 6 : i32
    %209 = arith.index_cast %c6_i32 : i32 to index
    %c0_53 = arith.constant 0 : index
    %c0_54 = arith.constant 0 : index
    %210 = vector.load %arg10[%209, %c0_53, %c0_54] : memref<8x8x384xf32, #tpu.memory_space<vmem>>, vector<1x8x384xf32>
    %211 = vector.shape_cast %210 : vector<1x8x384xf32> to vector<8x384xf32>
    %212 = arith.truncf %208 : vector<8x128xf32> to vector<8x128xbf16>
    %cst_55 = arith.constant dense<0.000000e+00> : vector<8x384xf32>
    %213 = tpu.matmul %212, %12, %cst_55 {dimension_numbers = #tpu.dot_dimension_numbers<[1], [0], [0], [1], [0, 0, 1, 1], [], []>} : vector<8x128xbf16>, vector<128x384xbf16>, vector<8x384xf32> -> vector<8x384xf32>
    %214 = arith.addf %213, %15 : vector<8x384xf32>
    %215 = vector.extract_strided_slice %211 {offsets = [0, 0], sizes = [8, 128], strides = [1, 1]} : vector<8x384xf32> to vector<8x128xf32>
    %216 = vector.extract_strided_slice %211 {offsets = [0, 128], sizes = [8, 128], strides = [1, 1]} : vector<8x384xf32> to vector<8x128xf32>
    %217 = vector.extract_strided_slice %211 {offsets = [0, 256], sizes = [8, 128], strides = [1, 1]} : vector<8x384xf32> to vector<8x128xf32>
    %218 = vector.extract_strided_slice %214 {offsets = [0, 0], sizes = [8, 128], strides = [1, 1]} : vector<8x384xf32> to vector<8x128xf32>
    %219 = vector.extract_strided_slice %214 {offsets = [0, 128], sizes = [8, 128], strides = [1, 1]} : vector<8x384xf32> to vector<8x128xf32>
    %220 = vector.extract_strided_slice %214 {offsets = [0, 256], sizes = [8, 128], strides = [1, 1]} : vector<8x384xf32> to vector<8x128xf32>
    %221 = arith.addf %215, %218 : vector<8x128xf32>
    %222 = arith.negf %221 : vector<8x128xf32>
    %223 = math.exp %222 : vector<8x128xf32>
    %cst_56 = arith.constant 1.000000e+00 : f32
    %224 = vector.broadcast %cst_56 : f32 to vector<8x128xf32>
    %225 = arith.addf %224, %223 : vector<8x128xf32>
    %226 = arith.divf %224, %225 : vector<8x128xf32>
    %227 = arith.addf %216, %219 : vector<8x128xf32>
    %228 = arith.negf %227 : vector<8x128xf32>
    %229 = math.exp %228 : vector<8x128xf32>
    %cst_57 = arith.constant 1.000000e+00 : f32
    %230 = vector.broadcast %cst_57 : f32 to vector<8x128xf32>
    %231 = arith.addf %230, %229 : vector<8x128xf32>
    %232 = arith.divf %230, %231 : vector<8x128xf32>
    %233 = arith.mulf %226, %220 : vector<8x128xf32>
    %234 = arith.addf %217, %233 : vector<8x128xf32>
    %235 = math.tanh %234 : vector<8x128xf32>
    %cst_58 = arith.constant 1.000000e+00 : f32
    %236 = vector.broadcast %cst_58 : f32 to vector<8x128xf32>
    %237 = arith.subf %236, %232 : vector<8x128xf32>
    %238 = arith.mulf %237, %235 : vector<8x128xf32>
    %239 = arith.mulf %232, %208 : vector<8x128xf32>
    %240 = arith.addf %238, %239 : vector<8x128xf32>
    %c7_i32 = arith.constant 7 : i32
    %241 = arith.index_cast %c7_i32 : i32 to index
    %c0_59 = arith.constant 0 : index
    %c0_60 = arith.constant 0 : index
    %242 = vector.load %arg10[%241, %c0_59, %c0_60] : memref<8x8x384xf32, #tpu.memory_space<vmem>>, vector<1x8x384xf32>
    %243 = vector.shape_cast %242 : vector<1x8x384xf32> to vector<8x384xf32>
    %244 = arith.truncf %240 : vector<8x128xf32> to vector<8x128xbf16>
    %cst_61 = arith.constant dense<0.000000e+00> : vector<8x384xf32>
    %245 = tpu.matmul %244, %12, %cst_61 {dimension_numbers = #tpu.dot_dimension_numbers<[1], [0], [0], [1], [0, 0, 1, 1], [], []>} : vector<8x128xbf16>, vector<128x384xbf16>, vector<8x384xf32> -> vector<8x384xf32>
    %246 = arith.addf %245, %15 : vector<8x384xf32>
    %247 = vector.extract_strided_slice %243 {offsets = [0, 0], sizes = [8, 128], strides = [1, 1]} : vector<8x384xf32> to vector<8x128xf32>
    %248 = vector.extract_strided_slice %243 {offsets = [0, 128], sizes = [8, 128], strides = [1, 1]} : vector<8x384xf32> to vector<8x128xf32>
    %249 = vector.extract_strided_slice %243 {offsets = [0, 256], sizes = [8, 128], strides = [1, 1]} : vector<8x384xf32> to vector<8x128xf32>
    %250 = vector.extract_strided_slice %246 {offsets = [0, 0], sizes = [8, 128], strides = [1, 1]} : vector<8x384xf32> to vector<8x128xf32>
    %251 = vector.extract_strided_slice %246 {offsets = [0, 128], sizes = [8, 128], strides = [1, 1]} : vector<8x384xf32> to vector<8x128xf32>
    %252 = vector.extract_strided_slice %246 {offsets = [0, 256], sizes = [8, 128], strides = [1, 1]} : vector<8x384xf32> to vector<8x128xf32>
    %253 = arith.addf %247, %250 : vector<8x128xf32>
    %254 = arith.negf %253 : vector<8x128xf32>
    %255 = math.exp %254 : vector<8x128xf32>
    %cst_62 = arith.constant 1.000000e+00 : f32
    %256 = vector.broadcast %cst_62 : f32 to vector<8x128xf32>
    %257 = arith.addf %256, %255 : vector<8x128xf32>
    %258 = arith.divf %256, %257 : vector<8x128xf32>
    %259 = arith.addf %248, %251 : vector<8x128xf32>
    %260 = arith.negf %259 : vector<8x128xf32>
    %261 = math.exp %260 : vector<8x128xf32>
    %cst_63 = arith.constant 1.000000e+00 : f32
    %262 = vector.broadcast %cst_63 : f32 to vector<8x128xf32>
    %263 = arith.addf %262, %261 : vector<8x128xf32>
    %264 = arith.divf %262, %263 : vector<8x128xf32>
    %265 = arith.mulf %258, %252 : vector<8x128xf32>
    %266 = arith.addf %249, %265 : vector<8x128xf32>
    %267 = math.tanh %266 : vector<8x128xf32>
    %cst_64 = arith.constant 1.000000e+00 : f32
    %268 = vector.broadcast %cst_64 : f32 to vector<8x128xf32>
    %269 = arith.subf %268, %264 : vector<8x128xf32>
    %270 = arith.mulf %269, %267 : vector<8x128xf32>
    %271 = arith.mulf %264, %240 : vector<8x128xf32>
    %272 = arith.addf %270, %271 : vector<8x128xf32>
    %c8_i32 = arith.constant 8 : i32
    %c0_65 = arith.constant 0 : index
    %c0_66 = arith.constant 0 : index
    %273 = vector.load %arg11[%c0_65, %c0_66] : memref<8x128xf32, #tpu.memory_space<vmem>>, vector<8x128xf32>
    tpu.vector_store %arg11[%c0_65, %c0_66], %272 {strides = array<i32>} : memref<8x128xf32, #tpu.memory_space<vmem>>, vector<8x128xf32>,
    %c0_i32_67 = arith.constant 0 : i32
    %274 = arith.cmpi eq, %arg1, %c0_i32_67 : i32
    %275 = arith.extui %274 : i1 to i32
    %c0_i32_68 = arith.constant 0 : i32
    %276 = arith.cmpi ne, %275, %c0_i32_68 : i32
    scf.if %276 {
      %c0_69 = arith.constant 0 : index
      %c0_70 = arith.constant 0 : index
      %277 = vector.load %arg7[%c0_69, %c0_70] : memref<1x128xf32, #tpu.memory_space<vmem>>, vector<1x128xf32>
      %278 = vector.broadcast %277 : vector<1x128xf32> to vector<8x128xf32>
      %279 = arith.mulf %272, %278 : vector<8x128xf32>
      %cst_71 = arith.constant dense<0.000000e+00> : vector<8xf32>
      %280 = vector.multi_reduction <add>, %279, %cst_71 [1] : vector<8x128xf32> to vector<8xf32>
      %281 = vector.shape_cast %280 : vector<8xf32> to vector<8x1xf32>
      %c0_72 = arith.constant 0 : index
      %c0_73 = arith.constant 0 : index
      %282 = vector.load %arg8[%c0_72, %c0_73] : memref<1x1xf32, #tpu.memory_space<vmem>>, vector<1x1xf32>
      %283 = vector.broadcast %282 : vector<1x1xf32> to vector<8x1xf32>
      %284 = arith.addf %281, %283 : vector<8x1xf32>
      %285 = vector.shape_cast %284 : vector<8x1xf32> to vector<8x1xf32>
      %286 = vector.broadcast %285 : vector<8x1xf32> to vector<8x128xf32>
      %c0_74 = arith.constant 0 : index
      %c0_75 = arith.constant 0 : index
      %287 = vector.load %arg9[%c0_74, %c0_75] : memref<8x128xf32, #tpu.memory_space<vmem>>, vector<8x128xf32>
      tpu.vector_store %arg9[%c0_74, %c0_75], %286 {strides = array<i32>} : memref<8x128xf32, #tpu.memory_space<vmem>>, vector<8x128xf32>,
    } else {
    }
    return
  }
  func.func @transform_0(%arg0: i32, %arg1: i32) -> (i32, i32, i32) {
    %c0_i32 = arith.constant 0 : i32
    %c0_i32_0 = arith.constant 0 : i32
    return %arg1, %arg0, %c0_i32 : i32, i32, i32
  }
  func.func @transform_1(%arg0: i32, %arg1: i32) -> (i32, i32) {
    %c0_i32 = arith.constant 0 : i32
    %c0_i32_0 = arith.constant 0 : i32
    %c0_i32_1 = arith.constant 0 : i32
    return %c0_i32, %c0_i32_0 : i32, i32
  }
  func.func @transform_2(%arg0: i32, %arg1: i32) -> (i32, i32) {
    %c0_i32 = arith.constant 0 : i32
    %c0_i32_0 = arith.constant 0 : i32
    %c0_i32_1 = arith.constant 0 : i32
    return %c0_i32, %c0_i32_0 : i32, i32
  }
  func.func @transform_3(%arg0: i32, %arg1: i32) -> (i32, i32) {
    %c0_i32 = arith.constant 0 : i32
    %c0_i32_0 = arith.constant 0 : i32
    %c0_i32_1 = arith.constant 0 : i32
    return %c0_i32, %c0_i32_0 : i32, i32
  }
  func.func @transform_4(%arg0: i32, %arg1: i32) -> (i32, i32) {
    %c0_i32 = arith.constant 0 : i32
    %c0_i32_0 = arith.constant 0 : i32
    %c0_i32_1 = arith.constant 0 : i32
    return %c0_i32, %c0_i32_0 : i32, i32
  }
  func.func @transform_5(%arg0: i32, %arg1: i32) -> (i32, i32) {
    %c0_i32 = arith.constant 0 : i32
    %c0_i32_0 = arith.constant 0 : i32
    %c0_i32_1 = arith.constant 0 : i32
    return %c0_i32, %c0_i32_0 : i32, i32
  }
  func.func @transform_6(%arg0: i32, %arg1: i32) -> (i32, i32) {
    %c0_i32 = arith.constant 0 : i32
    %c0_i32_0 = arith.constant 0 : i32
    %c0_i32_1 = arith.constant 0 : i32
    return %c0_i32, %c0_i32_0 : i32, i32
  }
  func.func @transform_7(%arg0: i32, %arg1: i32) -> (i32, i32) {
    %c0_i32 = arith.constant 0 : i32
    %c0_i32_0 = arith.constant 0 : i32
    return %arg0, %c0_i32 : i32, i32
  }
}

</mosaic_0001>

<llo_original>
// kernel: tpu_custom_call.1
$region0: #{tpu_custom_call.1}
  #allocation0 [shape = 'u32[]', space=smem, size = 0x4, offset = 0x4, fixed_abs, tag = 'smem constant byte address 0x4 - core index']
  #allocation1 [shape = 'u32[144,128]{1,0:T(1,128)}', space=vmem, size = 0x12000, scoped, tag = 'internal scratch']
  #allocation2 [shape = 'f32[8,8,384]{2,1,0:T(8,128)}', space=vmem, size = 0x18000, scoped, tag = 'scratch operand']
  #allocation3 [shape = 'f32[8,128]{1,0:T(8,128)}', space=vmem, size = 0x1000, scoped, tag = 'scratch operand']
  #allocation4 [shape = 'f32[1,1]{1,0:T(1,128)S(1)}', space=vmem, size = 0x200, scoped, tag = 'scoped memory for tpu_custom_call.1']
  %s0 = inlined_call_operand.hbm [shape: bf16[8,8,128], index: 0, kind: input, shape index: {}]
  %s1 = inlined_call_operand.hbm [shape: bf16[128,384], index: 1, kind: input, shape index: {}]
  %s2 = inlined_call_operand.hbm [shape: bf16[128,384], index: 2, kind: input, shape index: {}]
  %s3 = inlined_call_operand.vmem [shape: f32[1,384], index: 3, kind: input, shape index: {}]
  %s4 = inlined_call_operand.vmem [shape: f32[1,384], index: 4, kind: input, shape index: {}]
  %s5 = inlined_call_operand.vmem [shape: f32[1,128], index: 5, kind: input, shape index: {}]
  %s6 = inlined_call_operand.<no memory space> [shape: f32[1,1], index: 6, kind: input, shape index: {}]
  %s7 = inlined_call_operand.hbm [shape: f32[8,128], index: 7, kind: output, shape index: {}]
  %s8 = sld [smem:[#allocation0]]
  $region58: #{tpu_custom_call.1} parent=0
    _
  %s10 = ssub.s32 1, %s8
  %s11 = scalar_select 0, %s10, %s8
  %v12 = vstv %s6
  %13 = vst [vmem:[#allocation4] sm:$0x1] %v12
  $region1: #{tpu_custom_call.1} parent=0
    #allocation5 [shape = 'u8[16384]{0}', space=vmem, size = 0x4000, scoped, tag = 'input window, operand 0, single buffered']
    #allocation6 [shape = 's32[1]{0}', space=sflag, size = 0x4, scoped, tag = 'scoped memory for tpu_custom_call.1']
    #allocation7 [shape = 's32[1]{0}', space=sflag, size = 0x4, scoped, tag = 'scoped memory for tpu_custom_call.1']
    #allocation8 [shape = 'u8[98304]{0}', space=vmem, size = 0x18000, scoped, tag = 'input window, operand 1, single buffered']
    #allocation9 [shape = 's32[1]{0}', space=sflag, size = 0x4, scoped, tag = 'scoped memory for tpu_custom_call.1']
    #allocation10 [shape = 'u8[98304]{0}', space=vmem, size = 0x18000, scoped, tag = 'input window, operand 2, single buffered']
    #allocation11 [shape = 'u8[4096]{0}', space=vmem, size = 0x1000, scoped, tag = 'output window, operand 0, single buffered']
    %14 = vsyncpa [#allocation6], 0
    %15 = vsyncpa [#allocation9], 0
    %16 = vsyncpa [#allocation7], 0
    // Predicated region
    $region2: #{tpu_custom_call.1} parent=1 // pred_check
      _
    $region3: #{tpu_custom_call.1} parent=1 // pred_check_branch
      %18 = sbr.rel (0) target = $region5
    $region4: #{tpu_custom_call.1} parent=1 // pred_region
      %s20 = ssub.s32 512, 512
      %21 = vsyncadd [#allocation6], %s20
      %s22 = sshll.u32 [#allocation5], 4
      %s23 = int_to_ptr.vmem [resolvable:$true] %s22
      %28 = dma.hbm_to_vmem [thread:$0]  %s0, 512, %s23, [#allocation6], 64, 64, 4
    $region5: #{tpu_custom_call.1} parent=1 // pred_fallthru
      _
    // Predicated region
    $region6: #{tpu_custom_call.1} parent=1 // pred_check
      _
    $region7: #{tpu_custom_call.1} parent=1 // pred_check_branch
      %30 = sbr.rel (0) target = $region9
    $region8: #{tpu_custom_call.1} parent=1 // pred_region
      %s32 = ssub.s32 3072, 3072
      %33 = vsyncadd [#allocation9], %s32
      %s34 = sshll.u32 [#allocation8], 4
      %s35 = int_to_ptr.vmem [resolvable:$true] %s34
      %40 = dma.hbm_to_vmem [thread:$0]  %s1, 3072, %s35, [#allocation9], 192, 192, 12
    $region9: #{tpu_custom_call.1} parent=1 // pred_fallthru
      _
    // Predicated region
    $region10: #{tpu_custom_call.1} parent=1 // pred_check
      _
    $region11: #{tpu_custom_call.1} parent=1 // pred_check_branch
      %42 = sbr.rel (0) target = $region13
    $region12: #{tpu_custom_call.1} parent=1 // pred_region
      %s44 = ssub.s32 3072, 3072
      %45 = vsyncadd [#allocation9], %s44
      %s46 = sshll.u32 [#allocation10], 4
      %s47 = int_to_ptr.vmem [resolvable:$true] %s46
      %52 = dma.hbm_to_vmem [thread:$0]  %s2, 3072, %s47, [#allocation9], 192, 192, 12
    $region13: #{tpu_custom_call.1} parent=1 // pred_fallthru
      _
    // Predicated region
    $region14: #{tpu_custom_call.1} parent=1 // pred_check
      _
    $region15: #{tpu_custom_call.1} parent=1 // pred_check_branch
      %54 = sbr.rel (0) target = $region17
    $region16: #{tpu_custom_call.1} parent=1 // pred_region
      _
    $region17: #{tpu_custom_call.1} parent=1 // pred_fallthru
      _
    // Predicated region
    $region18: #{tpu_custom_call.1} parent=1 // pred_check
      _
    $region19: #{tpu_custom_call.1} parent=1 // pred_check_branch
      %56 = sbr.rel (0) target = $region21
    $region20: #{tpu_custom_call.1} parent=1 // pred_region
      _
    $region21: #{tpu_custom_call.1} parent=1 // pred_fallthru
      _
    // Predicated region
    $region22: #{tpu_custom_call.1} parent=1 // pred_check
      _
    $region23: #{tpu_custom_call.1} parent=1 // pred_check_branch
      %58 = sbr.rel (0) target = $region25
    $region24: #{tpu_custom_call.1} parent=1 // pred_region
      _
    $region25: #{tpu_custom_call.1} parent=1 // pred_fallthru
      _
    // Predicated region
    $region26: #{tpu_custom_call.1} parent=1 // pred_check
      _
    $region27: #{tpu_custom_call.1} parent=1 // pred_check_branch
      %60 = sbr.rel (0) target = $region29
    $region28: #{tpu_custom_call.1} parent=1 // pred_region
      _
    $region29: #{tpu_custom_call.1} parent=1 // pred_fallthru
      _
    // Predicated region
    $region30: #{tpu_custom_call.1} parent=1 // pred_check
      _
    $region31: #{tpu_custom_call.1} parent=1 // pred_check_branch
      %62 = sbr.rel (0) target = $region33
    $region32: #{tpu_custom_call.1} parent=1 // pred_region
      %63 = dma.done [#allocation6], 512
    $region33: #{tpu_custom_call.1} parent=1 // pred_fallthru
      _
    // Predicated region
    $region34: #{tpu_custom_call.1} parent=1 // pred_check
      _
    $region35: #{tpu_custom_call.1} parent=1 // pred_check_branch
      %65 = sbr.rel (0) target = $region37
    $region36: #{tpu_custom_call.1} parent=1 // pred_region
      %66 = dma.done [#allocation9], 3072
    $region37: #{tpu_custom_call.1} parent=1 // pred_fallthru
      _
    // Predicated region
    $region38: #{tpu_custom_call.1} parent=1 // pred_check
      _
    $region39: #{tpu_custom_call.1} parent=1 // pred_check_branch
      %68 = sbr.rel (0) target = $region41
    $region40: #{tpu_custom_call.1} parent=1 // pred_region
      %69 = dma.done [#allocation9], 3072
    $region41: #{tpu_custom_call.1} parent=1 // pred_fallthru
      _
    %p71 = scmp.eq.s32.totalorder 0, 0
    // Predicated region
    $region42: #{tpu_custom_call.1} parent=1 // pred_check
      %p72 = pneg %p71
    $region43: #{tpu_custom_call.1} parent=1 // pred_check_branch
      %74 = sbr.rel (%p72) target = $region45
    $region44: #{tpu_custom_call.1} parent=1 // pred_region
      %75 = vst [vmem:[#allocation3] sm:$0xff] 0.0
    $region45: #{tpu_custom_call.1} parent=1 // pred_fallthru
      _
    %v76 = vld [vmem:[#allocation5] sm:$0xf]
    %v77 = vld [vmem:[#allocation5 + $0x4] sm:$0xf]
    %v78 = vld [vmem:[#allocation5 + $0x8] sm:$0xf]
    %v79 = vld [vmem:[#allocation5 + $0xc] sm:$0xf]
    %v80 = vld [vmem:[#allocation5 + $0x10] sm:$0xf]
    %v81 = vld [vmem:[#allocation5 + $0x14] sm:$0xf]
    %v82 = vld [vmem:[#allocation5 + $0x18] sm:$0xf]
    %v83 = vld [vmem:[#allocation5 + $0x1c] sm:$0xf]
    %v84 = vld [vmem:[#allocation8] sm:$0xff]
    %v85 = vld [vmem:[#allocation8 + $0x8] sm:$0xf]
    %v86 = vld [vmem:[#allocation8 + $0xc] sm:$0xff]
    %v87 = vld [vmem:[#allocation8 + $0x14] sm:$0xf]
    %v88 = vld [vmem:[#allocation8 + $0x18] sm:$0xff]
    %v89 = vld [vmem:[#allocation8 + $0x20] sm:$0xf]
    %v90 = vld [vmem:[#allocation8 + $0x24] sm:$0xff]
    %v91 = vld [vmem:[#allocation8 + $0x2c] sm:$0xf]
    %v92 = vld [vmem:[#allocation8 + $0x30] sm:$0xff]
    %v93 = vld [vmem:[#allocation8 + $0x38] sm:$0xf]
    %v94 = vld [vmem:[#allocation8 + $0x3c] sm:$0xff]
    %v95 = vld [vmem:[#allocation8 + $0x44] sm:$0xf]
    %v96 = vld [vmem:[#allocation8 + $0x48] sm:$0xff]
    %v97 = vld [vmem:[#allocation8 + $0x50] sm:$0xf]
    %v98 = vld [vmem:[#allocation8 + $0x54] sm:$0xff]
    %v99 = vld [vmem:[#allocation8 + $0x5c] sm:$0xf]
    %v100 = vld [vmem:[#allocation8 + $0x60] sm:$0xff]
    %v101 = vld [vmem:[#allocation8 + $0x68] sm:$0xf]
    %v102 = vld [vmem:[#allocation8 + $0x6c] sm:$0xff]
    %v103 = vld [vmem:[#allocation8 + $0x74] sm:$0xf]
    %v104 = vld [vmem:[#allocation8 + $0x78] sm:$0xff]
    %v105 = vld [vmem:[#allocation8 + $0x80] sm:$0xf]
    %v106 = vld [vmem:[#allocation8 + $0x84] sm:$0xff]
    %v107 = vld [vmem:[#allocation8 + $0x8c] sm:$0xf]
    %v108 = vld [vmem:[#allocation8 + $0x90] sm:$0xff]
    %v109 = vld [vmem:[#allocation8 + $0x98] sm:$0xf]
    %v110 = vld [vmem:[#allocation8 + $0x9c] sm:$0xff]
    %v111 = vld [vmem:[#allocation8 + $0xa4] sm:$0xf]
    %v112 = vld [vmem:[#allocation8 + $0xa8] sm:$0xff]
    %v113 = vld [vmem:[#allocation8 + $0xb0] sm:$0xf]
    %v114 = vld [vmem:[#allocation8 + $0xb4] sm:$0xff]
    %v115 = vld [vmem:[#allocation8 + $0xbc] sm:$0xf]
    %v116 = vld [vmem:[%s3] sm:$0x7]
    %v118 = vlaneseq
    %v119 = vshrl.u32 %v118, 7
    %v120 = vsub.s32 0, %v119
    %v121 = vrot.slane %v116, %v120
    %v122 = vlaneseq
    %v123 = vshrl.u32 %v122, 7
    %v124 = vsub.s32 1, %v123
    %v125 = vrot.slane %v116, %v124
    %v126 = vlaneseq
    %v127 = vshrl.u32 %v126, 7
    %v128 = vsub.s32 2, %v127
    %v129 = vrot.slane %v116, %v128
    %v141 = vunpack.c.l.b16 %v76
    %v142 = vunpack.c.l.b16 %v77
    %v143 = vunpack.c.l.b16 %v78
    %v144 = vunpack.c.l.b16 %v79
    %v145 = vunpack.c.l.b16 %v80
    %v146 = vunpack.c.l.b16 %v81
    %v147 = vunpack.c.l.b16 %v82
    %v148 = vunpack.c.l.b16 %v83
    %v149 = vpack.c.b16 %v142, %v141
    %v150 = vpack.c.b16 %v144, %v143
    %v151 = vpack.c.b16 %v146, %v145
    %v152 = vpack.c.b16 %v148, %v147
    %v189 = vunpack.c.l.b16 %v84
    %v190 = vunpack.c.h.b16 %v84
    %v191 = vunpack.c.l.b16 %v85
    %v192 = vunpack.c.l.b16 %v86
    %v193 = vunpack.c.h.b16 %v86
    %v194 = vunpack.c.l.b16 %v87
    %v195 = vunpack.c.l.b16 %v88
    %v196 = vunpack.c.h.b16 %v88
    %v197 = vunpack.c.l.b16 %v89
    %v198 = vunpack.c.l.b16 %v90
    %v199 = vunpack.c.h.b16 %v90
    %v200 = vunpack.c.l.b16 %v91
    %v201 = vunpack.c.l.b16 %v92
    %v202 = vunpack.c.h.b16 %v92
    %v203 = vunpack.c.l.b16 %v93
    %v204 = vunpack.c.l.b16 %v94
    %v205 = vunpack.c.h.b16 %v94
    %v206 = vunpack.c.l.b16 %v95
    %v207 = vunpack.c.l.b16 %v96
    %v208 = vunpack.c.h.b16 %v96
    %v209 = vunpack.c.l.b16 %v97
    %v210 = vunpack.c.l.b16 %v98
    %v211 = vunpack.c.h.b16 %v98
    %v212 = vunpack.c.l.b16 %v99
    %v213 = vunpack.c.l.b16 %v100
    %v214 = vunpack.c.h.b16 %v100
    %v215 = vunpack.c.l.b16 %v101
    %v216 = vunpack.c.l.b16 %v102
    %v217 = vunpack.c.h.b16 %v102
    %v218 = vunpack.c.l.b16 %v103
    %v219 = vunpack.c.l.b16 %v104
    %v220 = vunpack.c.h.b16 %v104
    %v221 = vunpack.c.l.b16 %v105
    %v222 = vunpack.c.l.b16 %v106
    %v223 = vunpack.c.h.b16 %v106
    %v224 = vunpack.c.l.b16 %v107
    %v225 = vunpack.c.l.b16 %v108
    %v226 = vunpack.c.h.b16 %v108
    %v227 = vunpack.c.l.b16 %v109
    %v228 = vunpack.c.l.b16 %v110
    %v229 = vunpack.c.h.b16 %v110
    %v230 = vunpack.c.l.b16 %v111
    %v231 = vunpack.c.l.b16 %v112
    %v232 = vunpack.c.h.b16 %v112
    %v233 = vunpack.c.l.b16 %v113
    %v234 = vunpack.c.l.b16 %v114
    %v235 = vunpack.c.h.b16 %v114
    %v236 = vunpack.c.l.b16 %v115
    %v237 = vpack.c.b16 %v192, %v189
    %v238 = vpack.c.b16 %v193, %v190
    %v239 = vpack.c.b16 %v194, %v191
    %v240 = vpack.c.b16 %v198, %v195
    %v241 = vpack.c.b16 %v199, %v196
    %v242 = vpack.c.b16 %v200, %v197
    %v243 = vpack.c.b16 %v204, %v201
    %v244 = vpack.c.b16 %v205, %v202
    %v245 = vpack.c.b16 %v206, %v203
    %v246 = vpack.c.b16 %v210, %v207
    %v247 = vpack.c.b16 %v211, %v208
    %v248 = vpack.c.b16 %v212, %v209
    %v249 = vpack.c.b16 %v216, %v213
    %v250 = vpack.c.b16 %v217, %v214
    %v251 = vpack.c.b16 %v218, %v215
    %v252 = vpack.c.b16 %v222, %v219
    %v253 = vpack.c.b16 %v223, %v220
    %v254 = vpack.c.b16 %v224, %v221
    %v255 = vpack.c.b16 %v228, %v225
    %v256 = vpack.c.b16 %v229, %v226
    %v257 = vpack.c.b16 %v230, %v227
    %v258 = vpack.c.b16 %v234, %v231
    %v259 = vpack.c.b16 %v235, %v232
    %v260 = vpack.c.b16 %v236, %v233
    %285 = vmatprep.subr.bf16.mxu0 %v259
    %286 = vmatpush1.bf16.msra.mxu0 %v258
    %287 = vmatprep.subr.bf16.mxu0 %v256
    %288 = vmatpush1.bf16.msra.mxu0 %v255
    %289 = vmatprep.subr.bf16.mxu0 %v253
    %290 = vmatpush1.bf16.msra.mxu0 %v252
    %291 = vmatprep.subr.bf16.mxu0 %v250
    %292 = vmatpush1.bf16.msra.mxu0 %v249
    %293 = vmatprep.subr.bf16.mxu0 %v247
    %294 = vmatpush1.bf16.msra.mxu0 %v246
    %295 = vmatprep.subr.bf16.mxu0 %v244
    %296 = vmatpush1.bf16.msra.mxu0 %v243
    %297 = vmatprep.subr.bf16.mxu0 %v241
    %298 = vmatpush1.bf16.msra.mxu0 %v240
    %299 = vmatprep.subr.bf16.mxu0 %v238
    %300 = vmatpush1.bf16.msra.mxu0 %v237
    %301 = vmatprep.subr.bf16.mxu0 0
    %302 = vmatpush2.bf16.msra.mxu0 0
    %303 = vmatprep.subr.bf16.mxu0 0
    %304 = vmatpush2.bf16.msra.mxu0 0
    %305 = vmatprep.subr.bf16.mxu0 0
    %306 = vmatpush2.bf16.msra.mxu0 0
    %307 = vmatprep.subr.bf16.mxu0 0
    %308 = vmatpush2.bf16.msra.mxu0 0
    %309 = vmatprep.subr.bf16.mxu0 0
    %310 = vmatpush2.bf16.msra.mxu0 0
    %311 = vmatprep.subr.bf16.mxu0 0
    %312 = vmatpush2.bf16.msra.mxu0 0
    %313 = vmatprep.subr.bf16.mxu0 0
    %314 = vmatpush2.bf16.msra.mxu0 0
    %315 = vmatprep.subr.bf16.mxu0 0
    %316 = vmatpush2.bf16.msra.mxu0 0
    %317 = vmatprep.mubr.bf16.mxu0 0
    %318 = vmatmul.mubr.bf16.gmra.mxu0 %v149
    %v319 = vpop.f32.mrf.mxu0
    %v320 = vadd.f32 %v121, %v319
    %v321 = vpop.f32.mrf.mxu0
    %v322 = vadd.f32 %v125, %v321
    %v323 = vpop.f32.mrf.mxu0
    %v324 = vadd.f32 %v121, %v323
    %v325 = vpop.f32.mrf.mxu0
    %v326 = vadd.f32 %v125, %v325
    %327 = vmatprep.mubr.bf16.mxu0 0
    %328 = vmatmul.mubr.bf16.gmra.mxu0 %v150
    %v329 = vpop.f32.mrf.mxu0
    %v330 = vadd.f32 %v121, %v329
    %v331 = vpop.f32.mrf.mxu0
    %v332 = vadd.f32 %v125, %v331
    %v333 = vpop.f32.mrf.mxu0
    %v334 = vadd.f32 %v121, %v333
    %v335 = vpop.f32.mrf.mxu0
    %v336 = vadd.f32 %v125, %v335
    %337 = vmatprep.mubr.bf16.mxu0 0
    %338 = vmatmul.mubr.bf16.gmra.mxu0 %v151
    %v339 = vpop.f32.mrf.mxu0
    %v340 = vadd.f32 %v121, %v339
    %v341 = vpop.f32.mrf.mxu0
    %v342 = vadd.f32 %v125, %v341
    %v343 = vpop.f32.mrf.mxu0
    %v344 = vadd.f32 %v121, %v343
    %v345 = vpop.f32.mrf.mxu0
    %v346 = vadd.f32 %v125, %v345
    %347 = vmatprep.mubr.bf16.mxu0 0
    %348 = vmatmul.mubr.bf16.gmra.mxu0 %v152
    %v349 = vpop.f32.mrf.mxu0
    %v350 = vadd.f32 %v121, %v349
    %v351 = vpop.f32.mrf.mxu0
    %v352 = vadd.f32 %v125, %v351
    %v353 = vpop.f32.mrf.mxu0
    %v354 = vadd.f32 %v121, %v353
    %v355 = vpop.f32.mrf.mxu0
    %v356 = vadd.f32 %v125, %v355
    %357 = vdwg.mxu0
    %358 = vmatprep.subr.bf16.mxu0 0
    %359 = vmatpush1.bf16.msra.mxu0 %v260
    %360 = vmatprep.subr.bf16.mxu0 0
    %361 = vmatpush1.bf16.msra.mxu0 %v257
    %362 = vmatprep.subr.bf16.mxu0 0
    %363 = vmatpush1.bf16.msra.mxu0 %v254
    %364 = vmatprep.subr.bf16.mxu0 0
    %365 = vmatpush1.bf16.msra.mxu0 %v251
    %366 = vmatprep.subr.bf16.mxu0 0
    %367 = vmatpush1.bf16.msra.mxu0 %v248
    %368 = vmatprep.subr.bf16.mxu0 0
    %369 = vmatpush1.bf16.msra.mxu0 %v245
    %370 = vmatprep.subr.bf16.mxu0 0
    %371 = vmatpush1.bf16.msra.mxu0 %v242
    %372 = vmatprep.subr.bf16.mxu0 0
    %373 = vmatpush1.bf16.msra.mxu0 %v239
    %374 = vmatprep.subr.bf16.mxu0 0
    %375 = vmatpush2.bf16.msra.mxu0 0
    %376 = vmatprep.subr.bf16.mxu0 0
    %377 = vmatpush2.bf16.msra.mxu0 0
    %378 = vmatprep.subr.bf16.mxu0 0
    %379 = vmatpush2.bf16.msra.mxu0 0
    %380 = vmatprep.subr.bf16.mxu0 0
    %381 = vmatpush2.bf16.msra.mxu0 0
    %382 = vmatprep.subr.bf16.mxu0 0
    %383 = vmatpush2.bf16.msra.mxu0 0
    %384 = vmatprep.subr.bf16.mxu0 0
    %385 = vmatpush2.bf16.msra.mxu0 0
    %386 = vmatprep.subr.bf16.mxu0 0
    %387 = vmatpush2.bf16.msra.mxu0 0
    %388 = vmatprep.subr.bf16.mxu0 0
    %389 = vmatpush2.bf16.msra.mxu0 0
    %390 = vmatprep.mubr.bf16.mxu0 0
    %391 = vmatmul.mubr.bf16.gmra.mxu0 %v149
    %v392 = vpop.f32.mrf.mxu0
    %v393 = vadd.f32 %v129, %v392
    %v394 = vpop.f32.mrf.mxu0
    %v395 = vpop.f32.mrf.mxu0
    %v396 = vadd.f32 %v129, %v395
    %v397 = vpop.f32.mrf.mxu0
    %398 = vmatprep.mubr.bf16.mxu0 0
    %399 = vmatmul.mubr.bf16.gmra.mxu0 %v150
    %v400 = vpop.f32.mrf.mxu0
    %v401 = vadd.f32 %v129, %v400
    %v402 = vpop.f32.mrf.mxu0
    %v403 = vpop.f32.mrf.mxu0
    %v404 = vadd.f32 %v129, %v403
    %v405 = vpop.f32.mrf.mxu0
    %406 = vmatprep.mubr.bf16.mxu0 0
    %407 = vmatmul.mubr.bf16.gmra.mxu0 %v151
    %v408 = vpop.f32.mrf.mxu0
    %v409 = vadd.f32 %v129, %v408
    %v410 = vpop.f32.mrf.mxu0
    %v411 = vpop.f32.mrf.mxu0
    %v412 = vadd.f32 %v129, %v411
    %v413 = vpop.f32.mrf.mxu0
    %414 = vmatprep.mubr.bf16.mxu0 0
    %415 = vmatmul.mubr.bf16.gmra.mxu0 %v152
    %v416 = vpop.f32.mrf.mxu0
    %v417 = vadd.f32 %v129, %v416
    %v418 = vpop.f32.mrf.mxu0
    %v419 = vpop.f32.mrf.mxu0
    %v420 = vadd.f32 %v129, %v419
    %v421 = vpop.f32.mrf.mxu0
    %422 = vdwg.mxu0
    %423 = vst [vmem:[#allocation2] sm:$0xff] %v320
    %424 = vst [vmem:[#allocation2 + $0x8] sm:$0xff] %v322
    %425 = vst [vmem:[#allocation2 + $0x10] sm:$0xff] %v393
    %426 = vst [vmem:[#allocation2 + $0x18] sm:$0xff] %v324
    %427 = vst [vmem:[#allocation2 + $0x20] sm:$0xff] %v326
    %428 = vst [vmem:[#allocation2 + $0x28] sm:$0xff] %v396
    %429 = vst [vmem:[#allocation2 + $0x30] sm:$0xff] %v330
    %430 = vst [vmem:[#allocation2 + $0x38] sm:$0xff] %v332
    %431 = vst [vmem:[#allocation2 + $0x40] sm:$0xff] %v401
    %432 = vst [vmem:[#allocation2 + $0x48] sm:$0xff] %v334
    %433 = vst [vmem:[#allocation2 + $0x50] sm:$0xff] %v336
    %434 = vst [vmem:[#allocation2 + $0x58] sm:$0xff] %v404
    %435 = vst [vmem:[#allocation2 + $0x60] sm:$0xff] %v340
    %436 = vst [vmem:[#allocation2 + $0x68] sm:$0xff] %v342
    %437 = vst [vmem:[#allocation2 + $0x70] sm:$0xff] %v409
    %438 = vst [vmem:[#allocation2 + $0x78] sm:$0xff] %v344
    %439 = vst [vmem:[#allocation2 + $0x80] sm:$0xff] %v346
    %440 = vst [vmem:[#allocation2 + $0x88] sm:$0xff] %v412
    %441 = vst [vmem:[#allocation2 + $0x90] sm:$0xff] %v350
    %442 = vst [vmem:[#allocation2 + $0x98] sm:$0xff] %v352
    %443 = vst [vmem:[#allocation2 + $0xa0] sm:$0xff] %v417
    %444 = vst [vmem:[#allocation2 + $0xa8] sm:$0xff] %v354
    %445 = vst [vmem:[#allocation2 + $0xb0] sm:$0xff] %v356
    %446 = vst [vmem:[#allocation2 + $0xb8] sm:$0xff] %v420
    %v447 = vld [vmem:[#allocation10] sm:$0xff]
    %v448 = vld [vmem:[#allocation10 + $0x8] sm:$0xf]
    %v449 = vld [vmem:[#allocation10 + $0xc] sm:$0xff]
    %v450 = vld [vmem:[#allocation10 + $0x14] sm:$0xf]
    %v451 = vld [vmem:[#allocation10 + $0x18] sm:$0xff]
    %v452 = vld [vmem:[#allocation10 + $0x20] sm:$0xf]
    %v453 = vld [vmem:[#allocation10 + $0x24] sm:$0xff]
    %v454 = vld [vmem:[#allocation10 + $0x2c] sm:$0xf]
    %v455 = vld [vmem:[#allocation10 + $0x30] sm:$0xff]
    %v456 = vld [vmem:[#allocation10 + $0x38] sm:$0xf]
    %v457 = vld [vmem:[#allocation10 + $0x3c] sm:$0xff]
    %v458 = vld [vmem:[#allocation10 + $0x44] sm:$0xf]
    %v459 = vld [vmem:[#allocation10 + $0x48] sm:$0xff]
    %v460 = vld [vmem:[#allocation10 + $0x50] sm:$0xf]
    %v461 = vld [vmem:[#allocation10 + $0x54] sm:$0xff]
    %v462 = vld [vmem:[#allocation10 + $0x5c] sm:$0xf]
    %v463 = vld [vmem:[#allocation10 + $0x60] sm:$0xff]
    %v464 = vld [vmem:[#allocation10 + $0x68] sm:$0xf]
    %v465 = vld [vmem:[#allocation10 + $0x6c] sm:$0xff]
    %v466 = vld [vmem:[#allocation10 + $0x74] sm:$0xf]
    %v467 = vld [vmem:[#allocation10 + $0x78] sm:$0xff]
    %v468 = vld [vmem:[#allocation10 + $0x80] sm:$0xf]
    %v469 = vld [vmem:[#allocation10 + $0x84] sm:$0xff]
    %v470 = vld [vmem:[#allocation10 + $0x8c] sm:$0xf]
    %v471 = vld [vmem:[#allocation10 + $0x90] sm:$0xff]
    %v472 = vld [vmem:[#allocation10 + $0x98] sm:$0xf]
    %v473 = vld [vmem:[#allocation10 + $0x9c] sm:$0xff]
    %v474 = vld [vmem:[#allocation10 + $0xa4] sm:$0xf]
    %v475 = vld [vmem:[#allocation10 + $0xa8] sm:$0xff]
    %v476 = vld [vmem:[#allocation10 + $0xb0] sm:$0xf]
    %v477 = vld [vmem:[#allocation10 + $0xb4] sm:$0xff]
    %v478 = vld [vmem:[#allocation10 + $0xbc] sm:$0xf]
    %v479 = vld [vmem:[%s4] sm:$0x7]
    %v481 = vlaneseq
    %v482 = vshrl.u32 %v481, 7
    %v483 = vsub.s32 0, %v482
    %v484 = vrot.slane %v479, %v483
    %v485 = vlaneseq
    %v486 = vshrl.u32 %v485, 7
    %v487 = vsub.s32 1, %v486
    %v488 = vrot.slane %v479, %v487
    %v489 = vlaneseq
    %v490 = vshrl.u32 %v489, 7
    %v491 = vsub.s32 2, %v490
    %v492 = vrot.slane %v479, %v491
    %v496 = vld [vmem:[#allocation3] sm:$0xff]
    %v497 = vld [vmem:[#allocation2] sm:$0xff]
    %v498 = vld [vmem:[#allocation2 + $0x8] sm:$0xff]
    %v499 = vld [vmem:[#allocation2 + $0x10] sm:$0xff]
    %v500 = vpack.c.bf16 %v496, %v496
    %v533 = vunpack.c.l.b16 %v447
    %v534 = vunpack.c.h.b16 %v447
    %v535 = vunpack.c.l.b16 %v448
    %v536 = vunpack.c.l.b16 %v449
    %v537 = vunpack.c.h.b16 %v449
    %v538 = vunpack.c.l.b16 %v450
    %v539 = vunpack.c.l.b16 %v451
    %v540 = vunpack.c.h.b16 %v451
    %v541 = vunpack.c.l.b16 %v452
    %v542 = vunpack.c.l.b16 %v453
    %v543 = vunpack.c.h.b16 %v453
    %v544 = vunpack.c.l.b16 %v454
    %v545 = vunpack.c.l.b16 %v455
    %v546 = vunpack.c.h.b16 %v455
    %v547 = vunpack.c.l.b16 %v456
    %v548 = vunpack.c.l.b16 %v457
    %v549 = vunpack.c.h.b16 %v457
    %v550 = vunpack.c.l.b16 %v458
    %v551 = vunpack.c.l.b16 %v459
    %v552 = vunpack.c.h.b16 %v459
    %v553 = vunpack.c.l.b16 %v460
    %v554 = vunpack.c.l.b16 %v461
    %v555 = vunpack.c.h.b16 %v461
    %v556 = vunpack.c.l.b16 %v462
    %v557 = vunpack.c.l.b16 %v463
    %v558 = vunpack.c.h.b16 %v463
    %v559 = vunpack.c.l.b16 %v464
    %v560 = vunpack.c.l.b16 %v465
    %v561 = vunpack.c.h.b16 %v465
    %v562 = vunpack.c.l.b16 %v466
    %v563 = vunpack.c.l.b16 %v467
    %v564 = vunpack.c.h.b16 %v467
    %v565 = vunpack.c.l.b16 %v468
    %v566 = vunpack.c.l.b16 %v469
    %v567 = vunpack.c.h.b16 %v469
    %v568 = vunpack.c.l.b16 %v470
    %v569 = vunpack.c.l.b16 %v471
    %v570 = vunpack.c.h.b16 %v471
    %v571 = vunpack.c.l.b16 %v472
    %v572 = vunpack.c.l.b16 %v473
    %v573 = vunpack.c.h.b16 %v473
    %v574 = vunpack.c.l.b16 %v474
    %v575 = vunpack.c.l.b16 %v475
    %v576 = vunpack.c.h.b16 %v475
    %v577 = vunpack.c.l.b16 %v476
    %v578 = vunpack.c.l.b16 %v477
    %v579 = vunpack.c.h.b16 %v477
    %v580 = vunpack.c.l.b16 %v478
    %v581 = vpack.c.b16 %v536, %v533
    %v582 = vpack.c.b16 %v537, %v534
    %v583 = vpack.c.b16 %v538, %v535
    %v584 = vpack.c.b16 %v542, %v539
    %v585 = vpack.c.b16 %v543, %v540
    %v586 = vpack.c.b16 %v544, %v541
    %v587 = vpack.c.b16 %v548, %v545
    %v588 = vpack.c.b16 %v549, %v546
    %v589 = vpack.c.b16 %v550, %v547
    %v590 = vpack.c.b16 %v554, %v551
    %v591 = vpack.c.b16 %v555, %v552
    %v592 = vpack.c.b16 %v556, %v553
    %v593 = vpack.c.b16 %v560, %v557
    %v594 = vpack.c.b16 %v561, %v558
    %v595 = vpack.c.b16 %v562, %v559
    %v596 = vpack.c.b16 %v566, %v563
    %v597 = vpack.c.b16 %v567, %v564
    %v598 = vpack.c.b16 %v568, %v565
    %v599 = vpack.c.b16 %v572, %v569
    %v600 = vpack.c.b16 %v573, %v570
    %v601 = vpack.c.b16 %v574, %v571
    %v602 = vpack.c.b16 %v578, %v575
    %v603 = vpack.c.b16 %v579, %v576
    %v604 = vpack.c.b16 %v580, %v577
    %629 = vmatprep.subr.bf16.mxu0 %v603
    %630 = vmatpush1.bf16.msra.mxu0 %v602
    %631 = vmatprep.subr.bf16.mxu0 %v600
    %632 = vmatpush1.bf16.msra.mxu0 %v599
    %633 = vmatprep.subr.bf16.mxu0 %v597
    %634 = vmatpush1.bf16.msra.mxu0 %v596
    %635 = vmatprep.subr.bf16.mxu0 %v594
    %636 = vmatpush1.bf16.msra.mxu0 %v593
    %637 = vmatprep.subr.bf16.mxu0 %v591
    %638 = vmatpush1.bf16.msra.mxu0 %v590
    %639 = vmatprep.subr.bf16.mxu0 %v588
    %640 = vmatpush1.bf16.msra.mxu0 %v587
    %641 = vmatprep.subr.bf16.mxu0 %v585
    %642 = vmatpush1.bf16.msra.mxu0 %v584
    %643 = vmatprep.subr.bf16.mxu0 %v582
    %644 = vmatpush1.bf16.msra.mxu0 %v581
    %645 = vmatprep.subr.bf16.mxu0 0
    %646 = vmatpush2.bf16.msra.mxu0 0
    %647 = vmatprep.subr.bf16.mxu0 0
    %648 = vmatpush2.bf16.msra.mxu0 0
    %649 = vmatprep.subr.bf16.mxu0 0
    %650 = vmatpush2.bf16.msra.mxu0 0
    %651 = vmatprep.subr.bf16.mxu0 0
    %652 = vmatpush2.bf16.msra.mxu0 0
    %653 = vmatprep.subr.bf16.mxu0 0
    %654 = vmatpush2.bf16.msra.mxu0 0
    %655 = vmatprep.subr.bf16.mxu0 0
    %656 = vmatpush2.bf16.msra.mxu0 0
    %657 = vmatprep.subr.bf16.mxu0 0
    %658 = vmatpush2.bf16.msra.mxu0 0
    %659 = vmatprep.subr.bf16.mxu0 0
    %660 = vmatpush2.bf16.msra.mxu0 0
    %661 = vmatprep.mubr.bf16.mxu0 0
    %662 = vmatmul.mubr.bf16.gmra.mxu0 %v500
    %v663 = vpop.f32.mrf.mxu0
    %v664 = vadd.f32 %v484, %v663
    %v665 = vpop.f32.mrf.mxu0
    %v666 = vadd.f32 %v488, %v665
    %v667 = vpop.f32.mrf.mxu0
    %v668 = vpop.f32.mrf.mxu0
    %669 = vdwg.mxu0
    %670 = vmatprep.subr.bf16.mxu0 0
    %671 = vmatpush1.bf16.msra.mxu0 %v604
    %672 = vmatprep.subr.bf16.mxu0 0
    %673 = vmatpush1.bf16.msra.mxu0 %v601
    %674 = vmatprep.subr.bf16.mxu0 0
    %675 = vmatpush1.bf16.msra.mxu0 %v598
    %676 = vmatprep.subr.bf16.mxu0 0
    %677 = vmatpush1.bf16.msra.mxu0 %v595
    %678 = vmatprep.subr.bf16.mxu0 0
    %679 = vmatpush1.bf16.msra.mxu0 %v592
    %680 = vmatprep.subr.bf16.mxu0 0
    %681 = vmatpush1.bf16.msra.mxu0 %v589
    %682 = vmatprep.subr.bf16.mxu0 0
    %683 = vmatpush1.bf16.msra.mxu0 %v586
    %684 = vmatprep.subr.bf16.mxu0 0
    %685 = vmatpush1.bf16.msra.mxu0 %v583
    %686 = vmatprep.subr.bf16.mxu0 0
    %687 = vmatpush2.bf16.msra.mxu0 0
    %688 = vmatprep.subr.bf16.mxu0 0
    %689 = vmatpush2.bf16.msra.mxu0 0
    %690 = vmatprep.subr.bf16.mxu0 0
    %691 = vmatpush2.bf16.msra.mxu0 0
    %692 = vmatprep.subr.bf16.mxu0 0
    %693 = vmatpush2.bf16.msra.mxu0 0
    %694 = vmatprep.subr.bf16.mxu0 0
    %695 = vmatpush2.bf16.msra.mxu0 0
    %696 = vmatprep.subr.bf16.mxu0 0
    %697 = vmatpush2.bf16.msra.mxu0 0
    %698 = vmatprep.subr.bf16.mxu0 0
    %699 = vmatpush2.bf16.msra.mxu0 0
    %700 = vmatprep.subr.bf16.mxu0 0
    %701 = vmatpush2.bf16.msra.mxu0 0
    %702 = vmatprep.mubr.bf16.mxu0 0
    %703 = vmatmul.mubr.bf16.gmra.mxu0 %v500
    %v704 = vpop.f32.mrf.mxu0
    %v705 = vadd.f32 %v492, %v704
    %v706 = vpop.f32.mrf.mxu0
    %v707 = vpop.f32.mrf.mxu0
    %v708 = vpop.f32.mrf.mxu0
    %709 = vdwg.mxu0
    %v710 = vadd.f32 %v497, %v664
    %v711 = vxor.u32 %v710, 2147483648
    %v712 = vmul.f32 %v711, 1.442695
    %v713 = vpow.pop %v712
    %v714 = vadd.f32 %v713, 1.0
    %v715 = vrcp.pop %v714
    %v716 = vmul.f32 1.0, %v715
    %v717 = vadd.f32 %v498, %v666
    %v718 = vxor.u32 %v717, 2147483648
    %v719 = vmul.f32 %v718, 1.442695
    %v720 = vpow.pop %v719
    %v721 = vadd.f32 %v720, 1.0
    %v722 = vrcp.pop %v721
    %v723 = vmul.f32 1.0, %v722
    %v724 = vmul.f32 %v716, %v705
    %v725 = vadd.f32 %v499, %v724
    %v726 = vtanh.pop %v725
    %v727 = vsub.f32 1.0, %v723
    %v728 = vmul.f32 %v727, %v726
    %v729 = vmul.f32 %v723, %v496
    %v730 = vadd.f32 %v728, %v729
    %s731 = scalar_lea.vmem [#allocation2], 24
    %v732 = vld [vmem:[%s731] sm:$0xff]
    %v733 = vld [vmem:[%s731 + $0x8] sm:$0xff]
    %v734 = vld [vmem:[%s731 + $0x10] sm:$0xff]
    %v735 = vpack.c.bf16 %v730, %v730
    %736 = vmatprep.subr.bf16.mxu0 %v603
    %737 = vmatpush1.bf16.msra.mxu0 %v602
    %738 = vmatprep.subr.bf16.mxu0 %v600
    %739 = vmatpush1.bf16.msra.mxu0 %v599
    %740 = vmatprep.subr.bf16.mxu0 %v597
    %741 = vmatpush1.bf16.msra.mxu0 %v596
    %742 = vmatprep.subr.bf16.mxu0 %v594
    %743 = vmatpush1.bf16.msra.mxu0 %v593
    %744 = vmatprep.subr.bf16.mxu0 %v591
    %745 = vmatpush1.bf16.msra.mxu0 %v590
    %746 = vmatprep.subr.bf16.mxu0 %v588
    %747 = vmatpush1.bf16.msra.mxu0 %v587
    %748 = vmatprep.subr.bf16.mxu0 %v585
    %749 = vmatpush1.bf16.msra.mxu0 %v584
    %750 = vmatprep.subr.bf16.mxu0 %v582
    %751 = vmatpush1.bf16.msra.mxu0 %v581
    %752 = vmatprep.subr.bf16.mxu0 0
    %753 = vmatpush2.bf16.msra.mxu0 0
    %754 = vmatprep.subr.bf16.mxu0 0
    %755 = vmatpush2.bf16.msra.mxu0 0
    %756 = vmatprep.subr.bf16.mxu0 0
    %757 = vmatpush2.bf16.msra.mxu0 0
    %758 = vmatprep.subr.bf16.mxu0 0
    %759 = vmatpush2.bf16.msra.mxu0 0
    %760 = vmatprep.subr.bf16.mxu0 0
    %761 = vmatpush2.bf16.msra.mxu0 0
    %762 = vmatprep.subr.bf16.mxu0 0
    %763 = vmatpush2.bf16.msra.mxu0 0
    %764 = vmatprep.subr.bf16.mxu0 0
    %765 = vmatpush2.bf16.msra.mxu0 0
    %766 = vmatprep.subr.bf16.mxu0 0
    %767 = vmatpush2.bf16.msra.mxu0 0
    %768 = vmatprep.mubr.bf16.mxu0 0
    %769 = vmatmul.mubr.bf16.gmra.mxu0 %v735
    %v770 = vpop.f32.mrf.mxu0
    %v771 = vadd.f32 %v484, %v770
    %v772 = vpop.f32.mrf.mxu0
    %v773 = vadd.f32 %v488, %v772
    %v774 = vpop.f32.mrf.mxu0
    %v775 = vpop.f32.mrf.mxu0
    %776 = vdwg.mxu0
    %777 = vmatprep.subr.bf16.mxu0 0
    %778 = vmatpush1.bf16.msra.mxu0 %v604
    %779 = vmatprep.subr.bf16.mxu0 0
    %780 = vmatpush1.bf16.msra.mxu0 %v601
    %781 = vmatprep.subr.bf16.mxu0 0
    %782 = vmatpush1.bf16.msra.mxu0 %v598
    %783 = vmatprep.subr.bf16.mxu0 0
    %784 = vmatpush1.bf16.msra.mxu0 %v595
    %785 = vmatprep.subr.bf16.mxu0 0
    %786 = vmatpush1.bf16.msra.mxu0 %v592
    %787 = vmatprep.subr.bf16.mxu0 0
    %788 = vmatpush1.bf16.msra.mxu0 %v589
    %789 = vmatprep.subr.bf16.mxu0 0
    %790 = vmatpush1.bf16.msra.mxu0 %v586
    %791 = vmatprep.subr.bf16.mxu0 0
    %792 = vmatpush1.bf16.msra.mxu0 %v583
    %793 = vmatprep.subr.bf16.mxu0 0
    %794 = vmatpush2.bf16.msra.mxu0 0
    %795 = vmatprep.subr.bf16.mxu0 0
    %796 = vmatpush2.bf16.msra.mxu0 0
    %797 = vmatprep.subr.bf16.mxu0 0
    %798 = vmatpush2.bf16.msra.mxu0 0
    %799 = vmatprep.subr.bf16.mxu0 0
    %800 = vmatpush2.bf16.msra.mxu0 0
    %801 = vmatprep.subr.bf16.mxu0 0
    %802 = vmatpush2.bf16.msra.mxu0 0
    %803 = vmatprep.subr.bf16.mxu0 0
    %804 = vmatpush2.bf16.msra.mxu0 0
    %805 = vmatprep.subr.bf16.mxu0 0
    %806 = vmatpush2.bf16.msra.mxu0 0
    %807 = vmatprep.subr.bf16.mxu0 0
    %808 = vmatpush2.bf16.msra.mxu0 0
    %809 = vmatprep.mubr.bf16.mxu0 0
    %810 = vmatmul.mubr.bf16.gmra.mxu0 %v735
    %v811 = vpop.f32.mrf.mxu0
    %v812 = vadd.f32 %v492, %v811
    %v813 = vpop.f32.mrf.mxu0
    %v814 = vpop.f32.mrf.mxu0
    %v815 = vpop.f32.mrf.mxu0
    %816 = vdwg.mxu0
    %v817 = vadd.f32 %v732, %v771
    %v818 = vxor.u32 %v817, 2147483648
    %v819 = vmul.f32 %v818, 1.442695
    %v820 = vpow.pop %v819
    %v821 = vadd.f32 %v820, 1.0
    %v822 = vrcp.pop %v821
    %v823 = vmul.f32 1.0, %v822
    %v824 = vadd.f32 %v733, %v773
    %v825 = vxor.u32 %v824, 2147483648
    %v826 = vmul.f32 %v825, 1.442695
    %v827 = vpow.pop %v826
    %v828 = vadd.f32 %v827, 1.0
    %v829 = vrcp.pop %v828
    %v830 = vmul.f32 1.0, %v829
    %v831 = vmul.f32 %v823, %v812
    %v832 = vadd.f32 %v734, %v831
    %v833 = vtanh.pop %v832
    %v834 = vsub.f32 1.0, %v830
    %v835 = vmul.f32 %v834, %v833
    %v836 = vmul.f32 %v830, %v730
    %v837 = vadd.f32 %v835, %v836
    %s838 = scalar_lea.vmem [#allocation2], 48
    %v839 = vld [vmem:[%s838] sm:$0xff]
    %v840 = vld [vmem:[%s838 + $0x8] sm:$0xff]
    %v841 = vld [vmem:[%s838 + $0x10] sm:$0xff]
    %v842 = vpack.c.bf16 %v837, %v837
    %843 = vmatprep.subr.bf16.mxu0 %v603
    %844 = vmatpush1.bf16.msra.mxu0 %v602
    %845 = vmatprep.subr.bf16.mxu0 %v600
    %846 = vmatpush1.bf16.msra.mxu0 %v599
    %847 = vmatprep.subr.bf16.mxu0 %v597
    %848 = vmatpush1.bf16.msra.mxu0 %v596
    %849 = vmatprep.subr.bf16.mxu0 %v594
    %850 = vmatpush1.bf16.msra.mxu0 %v593
    %851 = vmatprep.subr.bf16.mxu0 %v591
    %852 = vmatpush1.bf16.msra.mxu0 %v590
    %853 = vmatprep.subr.bf16.mxu0 %v588
    %854 = vmatpush1.bf16.msra.mxu0 %v587
    %855 = vmatprep.subr.bf16.mxu0 %v585
    %856 = vmatpush1.bf16.msra.mxu0 %v584
    %857 = vmatprep.subr.bf16.mxu0 %v582
    %858 = vmatpush1.bf16.msra.mxu0 %v581
    %859 = vmatprep.subr.bf16.mxu0 0
    %860 = vmatpush2.bf16.msra.mxu0 0
    %861 = vmatprep.subr.bf16.mxu0 0
    %862 = vmatpush2.bf16.msra.mxu0 0
    %863 = vmatprep.subr.bf16.mxu0 0
    %864 = vmatpush2.bf16.msra.mxu0 0
    %865 = vmatprep.subr.bf16.mxu0 0
    %866 = vmatpush2.bf16.msra.mxu0 0
    %867 = vmatprep.subr.bf16.mxu0 0
    %868 = vmatpush2.bf16.msra.mxu0 0
    %869 = vmatprep.subr.bf16.mxu0 0
    %870 = vmatpush2.bf16.msra.mxu0 0
    %871 = vmatprep.subr.bf16.mxu0 0
    %872 = vmatpush2.bf16.msra.mxu0 0
    %873 = vmatprep.subr.bf16.mxu0 0
    %874 = vmatpush2.bf16.msra.mxu0 0
    %875 = vmatprep.mubr.bf16.mxu0 0
    %876 = vmatmul.mubr.bf16.gmra.mxu0 %v842
    %v877 = vpop.f32.mrf.mxu0
    %v878 = vadd.f32 %v484, %v877
    %v879 = vpop.f32.mrf.mxu0
    %v880 = vadd.f32 %v488, %v879
    %v881 = vpop.f32.mrf.mxu0
    %v882 = vpop.f32.mrf.mxu0
    %883 = vdwg.mxu0
    %884 = vmatprep.subr.bf16.mxu0 0
    %885 = vmatpush1.bf16.msra.mxu0 %v604
    %886 = vmatprep.subr.bf16.mxu0 0
    %887 = vmatpush1.bf16.msra.mxu0 %v601
    %888 = vmatprep.subr.bf16.mxu0 0
    %889 = vmatpush1.bf16.msra.mxu0 %v598
    %890 = vmatprep.subr.bf16.mxu0 0
    %891 = vmatpush1.bf16.msra.mxu0 %v595
    %892 = vmatprep.subr.bf16.mxu0 0
    %893 = vmatpush1.bf16.msra.mxu0 %v592
    %894 = vmatprep.subr.bf16.mxu0 0
    %895 = vmatpush1.bf16.msra.mxu0 %v589
    %896 = vmatprep.subr.bf16.mxu0 0
    %897 = vmatpush1.bf16.msra.mxu0 %v586
    %898 = vmatprep.subr.bf16.mxu0 0
    %899 = vmatpush1.bf16.msra.mxu0 %v583
    %900 = vmatprep.subr.bf16.mxu0 0
    %901 = vmatpush2.bf16.msra.mxu0 0
    %902 = vmatprep.subr.bf16.mxu0 0
    %903 = vmatpush2.bf16.msra.mxu0 0
    %904 = vmatprep.subr.bf16.mxu0 0
    %905 = vmatpush2.bf16.msra.mxu0 0
    %906 = vmatprep.subr.bf16.mxu0 0
    %907 = vmatpush2.bf16.msra.mxu0 0
    %908 = vmatprep.subr.bf16.mxu0 0
    %909 = vmatpush2.bf16.msra.mxu0 0
    %910 = vmatprep.subr.bf16.mxu0 0
    %911 = vmatpush2.bf16.msra.mxu0 0
    %912 = vmatprep.subr.bf16.mxu0 0
    %913 = vmatpush2.bf16.msra.mxu0 0
    %914 = vmatprep.subr.bf16.mxu0 0
    %915 = vmatpush2.bf16.msra.mxu0 0
    %916 = vmatprep.mubr.bf16.mxu0 0
    %917 = vmatmul.mubr.bf16.gmra.mxu0 %v842
    %v918 = vpop.f32.mrf.mxu0
    %v919 = vadd.f32 %v492, %v918
    %v920 = vpop.f32.mrf.mxu0
    %v921 = vpop.f32.mrf.mxu0
    %v922 = vpop.f32.mrf.mxu0
    %923 = vdwg.mxu0
    %v924 = vadd.f32 %v839, %v878
    %v925 = vxor.u32 %v924, 2147483648
    %v926 = vmul.f32 %v925, 1.442695
    %v927 = vpow.pop %v926
    %v928 = vadd.f32 %v927, 1.0
    %v929 = vrcp.pop %v928
    %v930 = vmul.f32 1.0, %v929
    %v931 = vadd.f32 %v840, %v880
    %v932 = vxor.u32 %v931, 2147483648
    %v933 = vmul.f32 %v932, 1.442695
    %v934 = vpow.pop %v933
    %v935 = vadd.f32 %v934, 1.0
    %v936 = vrcp.pop %v935
    %v937 = vmul.f32 1.0, %v936
    %v938 = vmul.f32 %v930, %v919
    %v939 = vadd.f32 %v841, %v938
    %v940 = vtanh.pop %v939
    %v941 = vsub.f32 1.0, %v937
    %v942 = vmul.f32 %v941, %v940
    %v943 = vmul.f32 %v937, %v837
    %v944 = vadd.f32 %v942, %v943
    %s945 = scalar_lea.vmem [#allocation2], 72
    %v946 = vld [vmem:[%s945] sm:$0xff]
    %v947 = vld [vmem:[%s945 + $0x8] sm:$0xff]
    %v948 = vld [vmem:[%s945 + $0x10] sm:$0xff]
    %v949 = vpack.c.bf16 %v944, %v944
    %950 = vmatprep.subr.bf16.mxu0 %v603
    %951 = vmatpush1.bf16.msra.mxu0 %v602
    %952 = vmatprep.subr.bf16.mxu0 %v600
    %953 = vmatpush1.bf16.msra.mxu0 %v599
    %954 = vmatprep.subr.bf16.mxu0 %v597
    %955 = vmatpush1.bf16.msra.mxu0 %v596
    %956 = vmatprep.subr.bf16.mxu0 %v594
    %957 = vmatpush1.bf16.msra.mxu0 %v593
    %958 = vmatprep.subr.bf16.mxu0 %v591
    %959 = vmatpush1.bf16.msra.mxu0 %v590
    %960 = vmatprep.subr.bf16.mxu0 %v588
    %961 = vmatpush1.bf16.msra.mxu0 %v587
    %962 = vmatprep.subr.bf16.mxu0 %v585
    %963 = vmatpush1.bf16.msra.mxu0 %v584
    %964 = vmatprep.subr.bf16.mxu0 %v582
    %965 = vmatpush1.bf16.msra.mxu0 %v581
    %966 = vmatprep.subr.bf16.mxu0 0
    %967 = vmatpush2.bf16.msra.mxu0 0
    %968 = vmatprep.subr.bf16.mxu0 0
    %969 = vmatpush2.bf16.msra.mxu0 0
    %970 = vmatprep.subr.bf16.mxu0 0
    %971 = vmatpush2.bf16.msra.mxu0 0
    %972 = vmatprep.subr.bf16.mxu0 0
    %973 = vmatpush2.bf16.msra.mxu0 0
    %974 = vmatprep.subr.bf16.mxu0 0
    %975 = vmatpush2.bf16.msra.mxu0 0
    %976 = vmatprep.subr.bf16.mxu0 0
    %977 = vmatpush2.bf16.msra.mxu0 0
    %978 = vmatprep.subr.bf16.mxu0 0
    %979 = vmatpush2.bf16.msra.mxu0 0
    %980 = vmatprep.subr.bf16.mxu0 0
    %981 = vmatpush2.bf16.msra.mxu0 0
    %982 = vmatprep.mubr.bf16.mxu0 0
    %983 = vmatmul.mubr.bf16.gmra.mxu0 %v949
    %v984 = vpop.f32.mrf.mxu0
    %v985 = vadd.f32 %v484, %v984
    %v986 = vpop.f32.mrf.mxu0
    %v987 = vadd.f32 %v488, %v986
    %v988 = vpop.f32.mrf.mxu0
    %v989 = vpop.f32.mrf.mxu0
    %990 = vdwg.mxu0
    %991 = vmatprep.subr.bf16.mxu0 0
    %992 = vmatpush1.bf16.msra.mxu0 %v604
    %993 = vmatprep.subr.bf16.mxu0 0
    %994 = vmatpush1.bf16.msra.mxu0 %v601
    %995 = vmatprep.subr.bf16.mxu0 0
    %996 = vmatpush1.bf16.msra.mxu0 %v598
    %997 = vmatprep.subr.bf16.mxu0 0
    %998 = vmatpush1.bf16.msra.mxu0 %v595
    %999 = vmatprep.subr.bf16.mxu0 0
    %1000 = vmatpush1.bf16.msra.mxu0 %v592
    %1001 = vmatprep.subr.bf16.mxu0 0
    %1002 = vmatpush1.bf16.msra.mxu0 %v589
    %1003 = vmatprep.subr.bf16.mxu0 0
    %1004 = vmatpush1.bf16.msra.mxu0 %v586
    %1005 = vmatprep.subr.bf16.mxu0 0
    %1006 = vmatpush1.bf16.msra.mxu0 %v583
    %1007 = vmatprep.subr.bf16.mxu0 0
    %1008 = vmatpush2.bf16.msra.mxu0 0
    %1009 = vmatprep.subr.bf16.mxu0 0
    %1010 = vmatpush2.bf16.msra.mxu0 0
    %1011 = vmatprep.subr.bf16.mxu0 0
    %1012 = vmatpush2.bf16.msra.mxu0 0
    %1013 = vmatprep.subr.bf16.mxu0 0
    %1014 = vmatpush2.bf16.msra.mxu0 0
    %1015 = vmatprep.subr.bf16.mxu0 0
    %1016 = vmatpush2.bf16.msra.mxu0 0
    %1017 = vmatprep.subr.bf16.mxu0 0
    %1018 = vmatpush2.bf16.msra.mxu0 0
    %1019 = vmatprep.subr.bf16.mxu0 0
    %1020 = vmatpush2.bf16.msra.mxu0 0
    %1021 = vmatprep.subr.bf16.mxu0 0
    %1022 = vmatpush2.bf16.msra.mxu0 0
    %1023 = vmatprep.mubr.bf16.mxu0 0
    %1024 = vmatmul.mubr.bf16.gmra.mxu0 %v949
    %v1025 = vpop.f32.mrf.mxu0
    %v1026 = vadd.f32 %v492, %v1025
    %v1027 = vpop.f32.mrf.mxu0
    %v1028 = vpop.f32.mrf.mxu0
    %v1029 = vpop.f32.mrf.mxu0
    %1030 = vdwg.mxu0
    %v1031 = vadd.f32 %v946, %v985
    %v1032 = vxor.u32 %v1031, 2147483648
    %v1033 = vmul.f32 %v1032, 1.442695
    %v1034 = vpow.pop %v1033
    %v1035 = vadd.f32 %v1034, 1.0
    %v1036 = vrcp.pop %v1035
    %v1037 = vmul.f32 1.0, %v1036
    %v1038 = vadd.f32 %v947, %v987
    %v1039 = vxor.u32 %v1038, 2147483648
    %v1040 = vmul.f32 %v1039, 1.442695
    %v1041 = vpow.pop %v1040
    %v1042 = vadd.f32 %v1041, 1.0
    %v1043 = vrcp.pop %v1042
    %v1044 = vmul.f32 1.0, %v1043
    %v1045 = vmul.f32 %v1037, %v1026
    %v1046 = vadd.f32 %v948, %v1045
    %v1047 = vtanh.pop %v1046
    %v1048 = vsub.f32 1.0, %v1044
    %v1049 = vmul.f32 %v1048, %v1047
    %v1050 = vmul.f32 %v1044, %v944
    %v1051 = vadd.f32 %v1049, %v1050
    %s1052 = scalar_lea.vmem [#allocation2], 96
    %v1053 = vld [vmem:[%s1052] sm:$0xff]
    %v1054 = vld [vmem:[%s1052 + $0x8] sm:$0xff]
    %v1055 = vld [vmem:[%s1052 + $0x10] sm:$0xff]
    %v1056 = vpack.c.bf16 %v1051, %v1051
    %1057 = vmatprep.subr.bf16.mxu0 %v603
    %1058 = vmatpush1.bf16.msra.mxu0 %v602
    %1059 = vmatprep.subr.bf16.mxu0 %v600
    %1060 = vmatpush1.bf16.msra.mxu0 %v599
    %1061 = vmatprep.subr.bf16.mxu0 %v597
    %1062 = vmatpush1.bf16.msra.mxu0 %v596
    %1063 = vmatprep.subr.bf16.mxu0 %v594
    %1064 = vmatpush1.bf16.msra.mxu0 %v593
    %1065 = vmatprep.subr.bf16.mxu0 %v591
    %1066 = vmatpush1.bf16.msra.mxu0 %v590
    %1067 = vmatprep.subr.bf16.mxu0 %v588
    %1068 = vmatpush1.bf16.msra.mxu0 %v587
    %1069 = vmatprep.subr.bf16.mxu0 %v585
    %1070 = vmatpush1.bf16.msra.mxu0 %v584
    %1071 = vmatprep.subr.bf16.mxu0 %v582
    %1072 = vmatpush1.bf16.msra.mxu0 %v581
    %1073 = vmatprep.subr.bf16.mxu0 0
    %1074 = vmatpush2.bf16.msra.mxu0 0
    %1075 = vmatprep.subr.bf16.mxu0 0
    %1076 = vmatpush2.bf16.msra.mxu0 0
    %1077 = vmatprep.subr.bf16.mxu0 0
    %1078 = vmatpush2.bf16.msra.mxu0 0
    %1079 = vmatprep.subr.bf16.mxu0 0
    %1080 = vmatpush2.bf16.msra.mxu0 0
    %1081 = vmatprep.subr.bf16.mxu0 0
    %1082 = vmatpush2.bf16.msra.mxu0 0
    %1083 = vmatprep.subr.bf16.mxu0 0
    %1084 = vmatpush2.bf16.msra.mxu0 0
    %1085 = vmatprep.subr.bf16.mxu0 0
    %1086 = vmatpush2.bf16.msra.mxu0 0
    %1087 = vmatprep.subr.bf16.mxu0 0
    %1088 = vmatpush2.bf16.msra.mxu0 0
    %1089 = vmatprep.mubr.bf16.mxu0 0
    %1090 = vmatmul.mubr.bf16.gmra.mxu0 %v1056
    %v1091 = vpop.f32.mrf.mxu0
    %v1092 = vadd.f32 %v484, %v1091
    %v1093 = vpop.f32.mrf.mxu0
    %v1094 = vadd.f32 %v488, %v1093
    %v1095 = vpop.f32.mrf.mxu0
    %v1096 = vpop.f32.mrf.mxu0
    %1097 = vdwg.mxu0
    %1098 = vmatprep.subr.bf16.mxu0 0
    %1099 = vmatpush1.bf16.msra.mxu0 %v604
    %1100 = vmatprep.subr.bf16.mxu0 0
    %1101 = vmatpush1.bf16.msra.mxu0 %v601
    %1102 = vmatprep.subr.bf16.mxu0 0
    %1103 = vmatpush1.bf16.msra.mxu0 %v598
    %1104 = vmatprep.subr.bf16.mxu0 0
    %1105 = vmatpush1.bf16.msra.mxu0 %v595
    %1106 = vmatprep.subr.bf16.mxu0 0
    %1107 = vmatpush1.bf16.msra.mxu0 %v592
    %1108 = vmatprep.subr.bf16.mxu0 0
    %1109 = vmatpush1.bf16.msra.mxu0 %v589
    %1110 = vmatprep.subr.bf16.mxu0 0
    %1111 = vmatpush1.bf16.msra.mxu0 %v586
    %1112 = vmatprep.subr.bf16.mxu0 0
    %1113 = vmatpush1.bf16.msra.mxu0 %v583
    %1114 = vmatprep.subr.bf16.mxu0 0
    %1115 = vmatpush2.bf16.msra.mxu0 0
    %1116 = vmatprep.subr.bf16.mxu0 0
    %1117 = vmatpush2.bf16.msra.mxu0 0
    %1118 = vmatprep.subr.bf16.mxu0 0
    %1119 = vmatpush2.bf16.msra.mxu0 0
    %1120 = vmatprep.subr.bf16.mxu0 0
    %1121 = vmatpush2.bf16.msra.mxu0 0
    %1122 = vmatprep.subr.bf16.mxu0 0
    %1123 = vmatpush2.bf16.msra.mxu0 0
    %1124 = vmatprep.subr.bf16.mxu0 0
    %1125 = vmatpush2.bf16.msra.mxu0 0
    %1126 = vmatprep.subr.bf16.mxu0 0
    %1127 = vmatpush2.bf16.msra.mxu0 0
    %1128 = vmatprep.subr.bf16.mxu0 0
    %1129 = vmatpush2.bf16.msra.mxu0 0
    %1130 = vmatprep.mubr.bf16.mxu0 0
    %1131 = vmatmul.mubr.bf16.gmra.mxu0 %v1056
    %v1132 = vpop.f32.mrf.mxu0
    %v1133 = vadd.f32 %v492, %v1132
    %v1134 = vpop.f32.mrf.mxu0
    %v1135 = vpop.f32.mrf.mxu0
    %v1136 = vpop.f32.mrf.mxu0
    %1137 = vdwg.mxu0
    %v1138 = vadd.f32 %v1053, %v1092
    %v1139 = vxor.u32 %v1138, 2147483648
    %v1140 = vmul.f32 %v1139, 1.442695
    %v1141 = vpow.pop %v1140
    %v1142 = vadd.f32 %v1141, 1.0
    %v1143 = vrcp.pop %v1142
    %v1144 = vmul.f32 1.0, %v1143
    %v1145 = vadd.f32 %v1054, %v1094
    %v1146 = vxor.u32 %v1145, 2147483648
    %v1147 = vmul.f32 %v1146, 1.442695
    %v1148 = vpow.pop %v1147
    %v1149 = vadd.f32 %v1148, 1.0
    %v1150 = vrcp.pop %v1149
    %v1151 = vmul.f32 1.0, %v1150
    %v1152 = vmul.f32 %v1144, %v1133
    %v1153 = vadd.f32 %v1055, %v1152
    %v1154 = vtanh.pop %v1153
    %v1155 = vsub.f32 1.0, %v1151
    %v1156 = vmul.f32 %v1155, %v1154
    %v1157 = vmul.f32 %v1151, %v1051
    %v1158 = vadd.f32 %v1156, %v1157
    %s1159 = scalar_lea.vmem [#allocation2], 120
    %v1160 = vld [vmem:[%s1159] sm:$0xff]
    %v1161 = vld [vmem:[%s1159 + $0x8] sm:$0xff]
    %v1162 = vld [vmem:[%s1159 + $0x10] sm:$0xff]
    %v1163 = vpack.c.bf16 %v1158, %v1158
    %1164 = vmatprep.subr.bf16.mxu0 %v603
    %1165 = vmatpush1.bf16.msra.mxu0 %v602
    %1166 = vmatprep.subr.bf16.mxu0 %v600
    %1167 = vmatpush1.bf16.msra.mxu0 %v599
    %1168 = vmatprep.subr.bf16.mxu0 %v597
    %1169 = vmatpush1.bf16.msra.mxu0 %v596
    %1170 = vmatprep.subr.bf16.mxu0 %v594
    %1171 = vmatpush1.bf16.msra.mxu0 %v593
    %1172 = vmatprep.subr.bf16.mxu0 %v591
    %1173 = vmatpush1.bf16.msra.mxu0 %v590
    %1174 = vmatprep.subr.bf16.mxu0 %v588
    %1175 = vmatpush1.bf16.msra.mxu0 %v587
    %1176 = vmatprep.subr.bf16.mxu0 %v585
    %1177 = vmatpush1.bf16.msra.mxu0 %v584
    %1178 = vmatprep.subr.bf16.mxu0 %v582
    %1179 = vmatpush1.bf16.msra.mxu0 %v581
    %1180 = vmatprep.subr.bf16.mxu0 0
    %1181 = vmatpush2.bf16.msra.mxu0 0
    %1182 = vmatprep.subr.bf16.mxu0 0
    %1183 = vmatpush2.bf16.msra.mxu0 0
    %1184 = vmatprep.subr.bf16.mxu0 0
    %1185 = vmatpush2.bf16.msra.mxu0 0
    %1186 = vmatprep.subr.bf16.mxu0 0
    %1187 = vmatpush2.bf16.msra.mxu0 0
    %1188 = vmatprep.subr.bf16.mxu0 0
    %1189 = vmatpush2.bf16.msra.mxu0 0
    %1190 = vmatprep.subr.bf16.mxu0 0
    %1191 = vmatpush2.bf16.msra.mxu0 0
    %1192 = vmatprep.subr.bf16.mxu0 0
    %1193 = vmatpush2.bf16.msra.mxu0 0
    %1194 = vmatprep.subr.bf16.mxu0 0
    %1195 = vmatpush2.bf16.msra.mxu0 0
    %1196 = vmatprep.mubr.bf16.mxu0 0
    %1197 = vmatmul.mubr.bf16.gmra.mxu0 %v1163
    %v1198 = vpop.f32.mrf.mxu0
    %v1199 = vadd.f32 %v484, %v1198
    %v1200 = vpop.f32.mrf.mxu0
    %v1201 = vadd.f32 %v488, %v1200
    %v1202 = vpop.f32.mrf.mxu0
    %v1203 = vpop.f32.mrf.mxu0
    %1204 = vdwg.mxu0
    %1205 = vmatprep.subr.bf16.mxu0 0
    %1206 = vmatpush1.bf16.msra.mxu0 %v604
    %1207 = vmatprep.subr.bf16.mxu0 0
    %1208 = vmatpush1.bf16.msra.mxu0 %v601
    %1209 = vmatprep.subr.bf16.mxu0 0
    %1210 = vmatpush1.bf16.msra.mxu0 %v598
    %1211 = vmatprep.subr.bf16.mxu0 0
    %1212 = vmatpush1.bf16.msra.mxu0 %v595
    %1213 = vmatprep.subr.bf16.mxu0 0
    %1214 = vmatpush1.bf16.msra.mxu0 %v592
    %1215 = vmatprep.subr.bf16.mxu0 0
    %1216 = vmatpush1.bf16.msra.mxu0 %v589
    %1217 = vmatprep.subr.bf16.mxu0 0
    %1218 = vmatpush1.bf16.msra.mxu0 %v586
    %1219 = vmatprep.subr.bf16.mxu0 0
    %1220 = vmatpush1.bf16.msra.mxu0 %v583
    %1221 = vmatprep.subr.bf16.mxu0 0
    %1222 = vmatpush2.bf16.msra.mxu0 0
    %1223 = vmatprep.subr.bf16.mxu0 0
    %1224 = vmatpush2.bf16.msra.mxu0 0
    %1225 = vmatprep.subr.bf16.mxu0 0
    %1226 = vmatpush2.bf16.msra.mxu0 0
    %1227 = vmatprep.subr.bf16.mxu0 0
    %1228 = vmatpush2.bf16.msra.mxu0 0
    %1229 = vmatprep.subr.bf16.mxu0 0
    %1230 = vmatpush2.bf16.msra.mxu0 0
    %1231 = vmatprep.subr.bf16.mxu0 0
    %1232 = vmatpush2.bf16.msra.mxu0 0
    %1233 = vmatprep.subr.bf16.mxu0 0
    %1234 = vmatpush2.bf16.msra.mxu0 0
    %1235 = vmatprep.subr.bf16.mxu0 0
    %1236 = vmatpush2.bf16.msra.mxu0 0
    %1237 = vmatprep.mubr.bf16.mxu0 0
    %1238 = vmatmul.mubr.bf16.gmra.mxu0 %v1163
    %v1239 = vpop.f32.mrf.mxu0
    %v1240 = vadd.f32 %v492, %v1239
    %v1241 = vpop.f32.mrf.mxu0
    %v1242 = vpop.f32.mrf.mxu0
    %v1243 = vpop.f32.mrf.mxu0
    %1244 = vdwg.mxu0
    %v1245 = vadd.f32 %v1160, %v1199
    %v1246 = vxor.u32 %v1245, 2147483648
    %v1247 = vmul.f32 %v1246, 1.442695
    %v1248 = vpow.pop %v1247
    %v1249 = vadd.f32 %v1248, 1.0
    %v1250 = vrcp.pop %v1249
    %v1251 = vmul.f32 1.0, %v1250
    %v1252 = vadd.f32 %v1161, %v1201
    %v1253 = vxor.u32 %v1252, 2147483648
    %v1254 = vmul.f32 %v1253, 1.442695
    %v1255 = vpow.pop %v1254
    %v1256 = vadd.f32 %v1255, 1.0
    %v1257 = vrcp.pop %v1256
    %v1258 = vmul.f32 1.0, %v1257
    %v1259 = vmul.f32 %v1251, %v1240
    %v1260 = vadd.f32 %v1162, %v1259
    %v1261 = vtanh.pop %v1260
    %v1262 = vsub.f32 1.0, %v1258
    %v1263 = vmul.f32 %v1262, %v1261
    %v1264 = vmul.f32 %v1258, %v1158
    %v1265 = vadd.f32 %v1263, %v1264
    %s1266 = scalar_lea.vmem [#allocation2], 144
    %v1267 = vld [vmem:[%s1266] sm:$0xff]
    %v1268 = vld [vmem:[%s1266 + $0x8] sm:$0xff]
    %v1269 = vld [vmem:[%s1266 + $0x10] sm:$0xff]
    %v1270 = vpack.c.bf16 %v1265, %v1265
    %1271 = vmatprep.subr.bf16.mxu0 %v603
    %1272 = vmatpush1.bf16.msra.mxu0 %v602
    %1273 = vmatprep.subr.bf16.mxu0 %v600
    %1274 = vmatpush1.bf16.msra.mxu0 %v599
    %1275 = vmatprep.subr.bf16.mxu0 %v597
    %1276 = vmatpush1.bf16.msra.mxu0 %v596
    %1277 = vmatprep.subr.bf16.mxu0 %v594
    %1278 = vmatpush1.bf16.msra.mxu0 %v593
    %1279 = vmatprep.subr.bf16.mxu0 %v591
    %1280 = vmatpush1.bf16.msra.mxu0 %v590
    %1281 = vmatprep.subr.bf16.mxu0 %v588
    %1282 = vmatpush1.bf16.msra.mxu0 %v587
    %1283 = vmatprep.subr.bf16.mxu0 %v585
    %1284 = vmatpush1.bf16.msra.mxu0 %v584
    %1285 = vmatprep.subr.bf16.mxu0 %v582
    %1286 = vmatpush1.bf16.msra.mxu0 %v581
    %1287 = vmatprep.subr.bf16.mxu0 0
    %1288 = vmatpush2.bf16.msra.mxu0 0
    %1289 = vmatprep.subr.bf16.mxu0 0
    %1290 = vmatpush2.bf16.msra.mxu0 0
    %1291 = vmatprep.subr.bf16.mxu0 0
    %1292 = vmatpush2.bf16.msra.mxu0 0
    %1293 = vmatprep.subr.bf16.mxu0 0
    %1294 = vmatpush2.bf16.msra.mxu0 0
    %1295 = vmatprep.subr.bf16.mxu0 0
    %1296 = vmatpush2.bf16.msra.mxu0 0
    %1297 = vmatprep.subr.bf16.mxu0 0
    %1298 = vmatpush2.bf16.msra.mxu0 0
    %1299 = vmatprep.subr.bf16.mxu0 0
    %1300 = vmatpush2.bf16.msra.mxu0 0
    %1301 = vmatprep.subr.bf16.mxu0 0
    %1302 = vmatpush2.bf16.msra.mxu0 0
    %1303 = vmatprep.mubr.bf16.mxu0 0
    %1304 = vmatmul.mubr.bf16.gmra.mxu0 %v1270
    %v1305 = vpop.f32.mrf.mxu0
    %v1306 = vadd.f32 %v484, %v1305
    %v1307 = vpop.f32.mrf.mxu0
    %v1308 = vadd.f32 %v488, %v1307
    %v1309 = vpop.f32.mrf.mxu0
    %v1310 = vpop.f32.mrf.mxu0
    %1311 = vdwg.mxu0
    %1312 = vmatprep.subr.bf16.mxu0 0
    %1313 = vmatpush1.bf16.msra.mxu0 %v604
    %1314 = vmatprep.subr.bf16.mxu0 0
    %1315 = vmatpush1.bf16.msra.mxu0 %v601
    %1316 = vmatprep.subr.bf16.mxu0 0
    %1317 = vmatpush1.bf16.msra.mxu0 %v598
    %1318 = vmatprep.subr.bf16.mxu0 0
    %1319 = vmatpush1.bf16.msra.mxu0 %v595
    %1320 = vmatprep.subr.bf16.mxu0 0
    %1321 = vmatpush1.bf16.msra.mxu0 %v592
    %1322 = vmatprep.subr.bf16.mxu0 0
    %1323 = vmatpush1.bf16.msra.mxu0 %v589
    %1324 = vmatprep.subr.bf16.mxu0 0
    %1325 = vmatpush1.bf16.msra.mxu0 %v586
    %1326 = vmatprep.subr.bf16.mxu0 0
    %1327 = vmatpush1.bf16.msra.mxu0 %v583
    %1328 = vmatprep.subr.bf16.mxu0 0
    %1329 = vmatpush2.bf16.msra.mxu0 0
    %1330 = vmatprep.subr.bf16.mxu0 0
    %1331 = vmatpush2.bf16.msra.mxu0 0
    %1332 = vmatprep.subr.bf16.mxu0 0
    %1333 = vmatpush2.bf16.msra.mxu0 0
    %1334 = vmatprep.subr.bf16.mxu0 0
    %1335 = vmatpush2.bf16.msra.mxu0 0
    %1336 = vmatprep.subr.bf16.mxu0 0
    %1337 = vmatpush2.bf16.msra.mxu0 0
    %1338 = vmatprep.subr.bf16.mxu0 0
    %1339 = vmatpush2.bf16.msra.mxu0 0
    %1340 = vmatprep.subr.bf16.mxu0 0
    %1341 = vmatpush2.bf16.msra.mxu0 0
    %1342 = vmatprep.subr.bf16.mxu0 0
    %1343 = vmatpush2.bf16.msra.mxu0 0
    %1344 = vmatprep.mubr.bf16.mxu0 0
    %1345 = vmatmul.mubr.bf16.gmra.mxu0 %v1270
    %v1346 = vpop.f32.mrf.mxu0
    %v1347 = vadd.f32 %v492, %v1346
    %v1348 = vpop.f32.mrf.mxu0
    %v1349 = vpop.f32.mrf.mxu0
    %v1350 = vpop.f32.mrf.mxu0
    %1351 = vdwg.mxu0
    %v1352 = vadd.f32 %v1267, %v1306
    %v1353 = vxor.u32 %v1352, 2147483648
    %v1354 = vmul.f32 %v1353, 1.442695
    %v1355 = vpow.pop %v1354
    %v1356 = vadd.f32 %v1355, 1.0
    %v1357 = vrcp.pop %v1356
    %v1358 = vmul.f32 1.0, %v1357
    %v1359 = vadd.f32 %v1268, %v1308
    %v1360 = vxor.u32 %v1359, 2147483648
    %v1361 = vmul.f32 %v1360, 1.442695
    %v1362 = vpow.pop %v1361
    %v1363 = vadd.f32 %v1362, 1.0
    %v1364 = vrcp.pop %v1363
    %v1365 = vmul.f32 1.0, %v1364
    %v1366 = vmul.f32 %v1358, %v1347
    %v1367 = vadd.f32 %v1269, %v1366
    %v1368 = vtanh.pop %v1367
    %v1369 = vsub.f32 1.0, %v1365
    %v1370 = vmul.f32 %v1369, %v1368
    %v1371 = vmul.f32 %v1365, %v1265
    %v1372 = vadd.f32 %v1370, %v1371
    %s1373 = scalar_lea.vmem [#allocation2], 168
    %v1374 = vld [vmem:[%s1373] sm:$0xff]
    %v1375 = vld [vmem:[%s1373 + $0x8] sm:$0xff]
    %v1376 = vld [vmem:[%s1373 + $0x10] sm:$0xff]
    %v1377 = vpack.c.bf16 %v1372, %v1372
    %1378 = vmatprep.subr.bf16.mxu0 %v603
    %1379 = vmatpush1.bf16.msra.mxu0 %v602
    %1380 = vmatprep.subr.bf16.mxu0 %v600
    %1381 = vmatpush1.bf16.msra.mxu0 %v599
    %1382 = vmatprep.subr.bf16.mxu0 %v597
    %1383 = vmatpush1.bf16.msra.mxu0 %v596
    %1384 = vmatprep.subr.bf16.mxu0 %v594
    %1385 = vmatpush1.bf16.msra.mxu0 %v593
    %1386 = vmatprep.subr.bf16.mxu0 %v591
    %1387 = vmatpush1.bf16.msra.mxu0 %v590
    %1388 = vmatprep.subr.bf16.mxu0 %v588
    %1389 = vmatpush1.bf16.msra.mxu0 %v587
    %1390 = vmatprep.subr.bf16.mxu0 %v585
    %1391 = vmatpush1.bf16.msra.mxu0 %v584
    %1392 = vmatprep.subr.bf16.mxu0 %v582
    %1393 = vmatpush1.bf16.msra.mxu0 %v581
    %1394 = vmatprep.subr.bf16.mxu0 0
    %1395 = vmatpush2.bf16.msra.mxu0 0
    %1396 = vmatprep.subr.bf16.mxu0 0
    %1397 = vmatpush2.bf16.msra.mxu0 0
    %1398 = vmatprep.subr.bf16.mxu0 0
    %1399 = vmatpush2.bf16.msra.mxu0 0
    %1400 = vmatprep.subr.bf16.mxu0 0
    %1401 = vmatpush2.bf16.msra.mxu0 0
    %1402 = vmatprep.subr.bf16.mxu0 0
    %1403 = vmatpush2.bf16.msra.mxu0 0
    %1404 = vmatprep.subr.bf16.mxu0 0
    %1405 = vmatpush2.bf16.msra.mxu0 0
    %1406 = vmatprep.subr.bf16.mxu0 0
    %1407 = vmatpush2.bf16.msra.mxu0 0
    %1408 = vmatprep.subr.bf16.mxu0 0
    %1409 = vmatpush2.bf16.msra.mxu0 0
    %1410 = vmatprep.mubr.bf16.mxu0 0
    %1411 = vmatmul.mubr.bf16.gmra.mxu0 %v1377
    %v1412 = vpop.f32.mrf.mxu0
    %v1413 = vadd.f32 %v484, %v1412
    %v1414 = vpop.f32.mrf.mxu0
    %v1415 = vadd.f32 %v488, %v1414
    %v1416 = vpop.f32.mrf.mxu0
    %v1417 = vpop.f32.mrf.mxu0
    %1418 = vdwg.mxu0
    %1419 = vmatprep.subr.bf16.mxu0 0
    %1420 = vmatpush1.bf16.msra.mxu0 %v604
    %1421 = vmatprep.subr.bf16.mxu0 0
    %1422 = vmatpush1.bf16.msra.mxu0 %v601
    %1423 = vmatprep.subr.bf16.mxu0 0
    %1424 = vmatpush1.bf16.msra.mxu0 %v598
    %1425 = vmatprep.subr.bf16.mxu0 0
    %1426 = vmatpush1.bf16.msra.mxu0 %v595
    %1427 = vmatprep.subr.bf16.mxu0 0
    %1428 = vmatpush1.bf16.msra.mxu0 %v592
    %1429 = vmatprep.subr.bf16.mxu0 0
    %1430 = vmatpush1.bf16.msra.mxu0 %v589
    %1431 = vmatprep.subr.bf16.mxu0 0
    %1432 = vmatpush1.bf16.msra.mxu0 %v586
    %1433 = vmatprep.subr.bf16.mxu0 0
    %1434 = vmatpush1.bf16.msra.mxu0 %v583
    %1435 = vmatprep.subr.bf16.mxu0 0
    %1436 = vmatpush2.bf16.msra.mxu0 0
    %1437 = vmatprep.subr.bf16.mxu0 0
    %1438 = vmatpush2.bf16.msra.mxu0 0
    %1439 = vmatprep.subr.bf16.mxu0 0
    %1440 = vmatpush2.bf16.msra.mxu0 0
    %1441 = vmatprep.subr.bf16.mxu0 0
    %1442 = vmatpush2.bf16.msra.mxu0 0
    %1443 = vmatprep.subr.bf16.mxu0 0
    %1444 = vmatpush2.bf16.msra.mxu0 0
    %1445 = vmatprep.subr.bf16.mxu0 0
    %1446 = vmatpush2.bf16.msra.mxu0 0
    %1447 = vmatprep.subr.bf16.mxu0 0
    %1448 = vmatpush2.bf16.msra.mxu0 0
    %1449 = vmatprep.subr.bf16.mxu0 0
    %1450 = vmatpush2.bf16.msra.mxu0 0
    %1451 = vmatprep.mubr.bf16.mxu0 0
    %1452 = vmatmul.mubr.bf16.gmra.mxu0 %v1377
    %v1453 = vpop.f32.mrf.mxu0
    %v1454 = vadd.f32 %v492, %v1453
    %v1455 = vpop.f32.mrf.mxu0
    %v1456 = vpop.f32.mrf.mxu0
    %v1457 = vpop.f32.mrf.mxu0
    %1458 = vdwg.mxu0
    %v1459 = vadd.f32 %v1374, %v1413
    %v1460 = vxor.u32 %v1459, 2147483648
    %v1461 = vmul.f32 %v1460, 1.442695
    %v1462 = vpow.pop %v1461
    %v1463 = vadd.f32 %v1462, 1.0
    %v1464 = vrcp.pop %v1463
    %v1465 = vmul.f32 1.0, %v1464
    %v1466 = vadd.f32 %v1375, %v1415
    %v1467 = vxor.u32 %v1466, 2147483648
    %v1468 = vmul.f32 %v1467, 1.442695
    %v1469 = vpow.pop %v1468
    %v1470 = vadd.f32 %v1469, 1.0
    %v1471 = vrcp.pop %v1470
    %v1472 = vmul.f32 1.0, %v1471
    %v1473 = vmul.f32 %v1465, %v1454
    %v1474 = vadd.f32 %v1376, %v1473
    %v1475 = vtanh.pop %v1474
    %v1476 = vsub.f32 1.0, %v1472
    %v1477 = vmul.f32 %v1476, %v1475
    %v1478 = vmul.f32 %v1472, %v1372
    %v1479 = vadd.f32 %v1477, %v1478
    %1480 = vst [vmem:[#allocation3] sm:$0xff] %v1479
    // Predicated region
    $region46: #{tpu_custom_call.1} parent=1 // pred_check
      %p1481 = pneg %p71
    $region47: #{tpu_custom_call.1} parent=1 // pred_check_branch
      %1483 = sbr.rel (%p1481) target = $region49
    $region48: #{tpu_custom_call.1} parent=1 // pred_region
      %v1484 = vld [vmem:[%s5] sm:$0x1]
      %v1486 = vlaneseq
      %v1487 = vshrl.u32 %v1486, 7
      %v1488 = vsub.s32 0, %v1487
      %v1489 = vrot.slane %v1484, %v1488
      %v1491 = vmul.f32 %v1479, %v1489
      %1492 = vadd.xlane.f32.xlu0 %v1491
      %v1493 = vpop.xlane.xlu0 %1492
      %v1494 = vld [vmem:[#allocation4] sm:$0x1]
      %v1496 = vlaneseq
      %v1497 = vshrl.u32 %v1496, 7
      %v1498 = vsub.s32 0, %v1497
      %v1499 = vrot.slane %v1494, %v1498
      %v1501 = vadd.f32 %v1493, %v1499
      %1503 = vset.pattern.permute.xlu0 0
      %1504 = vperm.xlu0 %1503, %v1501
      %v1505 = vpop.permute.xlu0 %1504
      %1507 = vst [vmem:[#allocation11] sm:$0xff] %v1505
    $region49: #{tpu_custom_call.1} parent=1 // pred_fallthru
      _
    // Predicated region
    $region50: #{tpu_custom_call.1} parent=1 // pred_check
      _
    $region51: #{tpu_custom_call.1} parent=1 // pred_check_branch
      %1509 = sbr.rel (0) target = $region53
    $region52: #{tpu_custom_call.1} parent=1 // pred_region
      %s1511 = ssub.s32 128, 128
      %1512 = vsyncadd [#allocation7], %s1511
      %s1514 = sshll.u32 [#allocation11], 4
      %s1515 = int_to_ptr.vmem [resolvable:$true] %s1514
      %1517 = dma.vmem_to_hbm [thread:$0]  %s1515, 128, %s7, [#allocation7]
    $region53: #{tpu_custom_call.1} parent=1 // pred_fallthru
      _
    // Predicated region
    $region54: #{tpu_custom_call.1} parent=1 // pred_check
      _
    $region55: #{tpu_custom_call.1} parent=1 // pred_check_branch
      %1519 = sbr.rel (0) target = $region57
    $region56: #{tpu_custom_call.1} parent=1 // pred_region
      %1520 = dma.done [#allocation7], 128
    $region57: #{tpu_custom_call.1} parent=1 // pred_fallthru
      _
    %1521 = vsyncpa [#allocation6], 1
    %1522 = vsyncpa [#allocation9], 1
    %1523 = vsyncpa [#allocation7], 1

</llo_original>
